<compile_context>
chip_gen: v6e
topology: v6e:2x2x1
jax: 0.10.0
libtpu: 0.0.40
codegen_flags: <defaults>
</compile_context>

<pallas_src>
import math

import jax
import jax.numpy as jnp
from jax.experimental import pallas as pl
from jax.experimental.pallas import tpu as pltpu

NUM_EXPERTS = 4
HIDDEN = 64


# ----------------------------------------------------------------------------
# Kernel 1: embedding MLP (two 1x1 convs + ReLU) + routing (sigmoid) + offset
# ----------------------------------------------------------------------------
def _embed_heads_kernel(inp_ref, w1_ref, b1_ref, w2_ref, b2_ref,
                        wr_ref, br_ref, wo_ref, bo_ref,
                        rout_ref, off_ref):
    xin = inp_ref[...].astype(jnp.float32)                                  # (4, P)
    h1 = jnp.maximum(
        jnp.dot(w1_ref[...], xin, preferred_element_type=jnp.float32) + b1_ref[...], 0.0)
    h2 = jnp.maximum(
        jnp.dot(w2_ref[...], h1, preferred_element_type=jnp.float32) + b2_ref[...], 0.0)
    logits = jnp.dot(wr_ref[...], h2, preferred_element_type=jnp.float32) + br_ref[...]
    rout_ref[...] = (1.0 / (1.0 + jnp.exp(-logits))).astype(rout_ref.dtype)  # sigmoid
    off_ref[...] = (jnp.dot(wo_ref[...], h2, preferred_element_type=jnp.float32)
                    + bo_ref[...]).astype(off_ref.dtype)


# ----------------------------------------------------------------------------
# Kernel 2: per-pixel MoE compress -> expand dynamic 1x1 conv + residual
# ----------------------------------------------------------------------------
def _moe_dynconv_kernel(fea_ref, rout_ref, wc_ref, we_ref, o_ref):
    c, _ = fea_ref.shape
    e_num = rout_ref.shape[0]
    c8 = wc_ref.shape[0] // e_num

    f = fea_ref[...].astype(jnp.float32)                                    # (C, P)
    r = rout_ref[...].astype(jnp.float32)                                   # (E, P)

    # compress: y_e = Wc_e @ f for all experts at once, then gate per pixel.
    y = jnp.dot(wc_ref[...], f, preferred_element_type=jnp.float32)         # (E*C8, P)
    comp = jnp.zeros((c8, f.shape[1]), jnp.float32)
    for e in range(e_num):                                                   # E small, unrolled
        comp = comp + r[e:e + 1, :] * y[e * c8:(e + 1) * c8, :]

    # expand: z_e = We_e @ comp for all experts, gate per pixel; residual folded in.
    z = jnp.dot(we_ref[...], comp, preferred_element_type=jnp.float32)      # (E*C, P)
    acc = f                                                                  # residual
    for e in range(e_num):
        acc = acc + r[e:e + 1, :] * z[e * c:(e + 1) * c, :]

    o_ref[...] = acc.astype(o_ref.dtype)


# ----------------------------------------------------------------------------
# Plain-JAX helpers (coordinate features, bilinear grid sample)
# ----------------------------------------------------------------------------
def build_coord_input(key, bs, h, w, scale):
    """The 'input' tensor of the PyTorch forward: [rand*1, 1/scale, coor_h, coor_w]."""
    H_out, W_out = round(scale * h), round(scale * w)
    assert H_out == W_out, "module's random mask is square; requires sH == sW"
    yy = jnp.arange(H_out, dtype=jnp.float32)
    xx = jnp.arange(W_out, dtype=jnp.float32)
    coor_h = (yy + 0.5) / scale - jnp.floor((yy + 0.5) / scale + 0.001) - 0.5
    coor_w = (xx + 0.5) / scale - jnp.floor((xx + 0.5) / scale + 0.001) - 0.5
    base = jnp.stack([
        jnp.ones((H_out, W_out), jnp.float32),
        jnp.full((H_out, W_out), 1.0 / scale, jnp.float32),
        jnp.broadcast_to(coor_h[:, None], (H_out, W_out)),
        jnp.broadcast_to(coor_w[None, :], (H_out, W_out)),
    ], axis=0)                                                              # (4, sH, sW)
    rand = jax.random.uniform(key, (bs, 1, H_out, W_out), jnp.float32)      # torch.rand analog
    mult = jnp.concatenate([rand, jnp.ones((bs, 3, H_out, W_out), jnp.float32)], axis=1)
    return base[None] * mult                                                # (bs, 4, sH, sW)


def grid_sample_bilinear(x, offset, scale):
    """Equivalent of meta_sr.grid_sample: F.grid_sample(bilinear, zeros, align_corners=True).
    The [-1,1] normalization cancels; source coords are ((i+0.5)/scale - 0.5) + offset."""
    bs, c, h, w = x.shape
    H_out, W_out = offset.shape[2], offset.shape[3]
    ix = ((jnp.arange(W_out, dtype=jnp.float32) + 0.5) / scale - 0.5)[None, None, :] + offset[:, 0]
    iy = ((jnp.arange(H_out, dtype=jnp.float32) + 0.5) / scale - 0.5)[None, :, None] + offset[:, 1]
    x0 = jnp.floor(ix); y0 = jnp.floor(iy)
    x1 = x0 + 1.0;      y1 = y0 + 1.0
    wx1 = ix - x0; wx0 = 1.0 - wx1
    wy1 = iy - y0; wy0 = 1.0 - wy1
    x_flat = x.reshape(bs, c, h * w)

    def corner(yc, xc):
        valid = (xc >= 0) & (xc <= w - 1) & (yc >= 0) & (yc <= h - 1)
        xi = jnp.clip(xc, 0, w - 1).astype(jnp.int32)
        yi = jnp.clip(yc, 0, h - 1).astype(jnp.int32)
        idx = (yi * w + xi).reshape(bs, 1, H_out * W_out)
        idx = jnp.broadcast_to(idx, (bs, c, H_out * W_out))
        g = jnp.take_along_axis(x_flat, idx, axis=2).reshape(bs, c, H_out, W_out)
        return jnp.where(valid[:, None, :, :], g, 0.0)

    return (corner(y0, x0) * (wy0 * wx0)[:, None]
            + corner(y0, x1) * (wy0 * wx1)[:, None]
            + corner(y1, x0) * (wy1 * wx0)[:, None]
            + corner(y1, x1) * (wy1 * wx1)[:, None])


# ----------------------------------------------------------------------------
# Parameters (synthetic, matching the module's shapes / init bounds)
# ----------------------------------------------------------------------------
def init_params(key, channels, num_experts=NUM_EXPERTS):
    c8 = channels // 8
    ks = jax.random.split(key, 10)

    def u(k, shape, bound):
        return jax.random.uniform(k, shape, jnp.float32, -bound, bound)

    # body: Conv2d(4,64,1)+ReLU, Conv2d(64,64,1)+ReLU ; heads: routing (E), offset (2)
    w1 = u(ks[0], (HIDDEN, 4), 1.0 / math.sqrt(4));      b1 = u(ks[1], (HIDDEN, 1), 1.0 / math.sqrt(4))
    w2 = u(ks[2], (HIDDEN, HIDDEN), 1.0 / math.sqrt(HIDDEN)); b2 = u(ks[3], (HIDDEN, 1), 1.0 / math.sqrt(HIDDEN))
    wr = u(ks[4], (num_experts, HIDDEN), 1.0 / math.sqrt(HIDDEN)); br = u(ks[5], (num_experts, 1), 1.0 / math.sqrt(HIDDEN))
    wo = u(ks[6], (2, HIDDEN), 1.0 / math.sqrt(HIDDEN)); bo = u(ks[7], (2, 1), 1.0 / math.sqrt(HIDDEN))
    # expert pools, kaiming_uniform(a=sqrt(5)) -> bound = 1/sqrt(fan_in)
    wc = u(ks[8], (num_experts, c8, channels), 1.0 / math.sqrt(channels))
    we = u(ks[9], (num_experts, channels, c8), 1.0 / math.sqrt(c8))
    return dict(w1=w1, b1=b1, w2=w2, b2=b2, wr=wr, br=br, wo=wo, bo=bo,
                weight_compress=wc, weight_expand=we)


# ----------------------------------------------------------------------------
# Forward (Pallas)
# ----------------------------------------------------------------------------
def _pick_pixel_tile(hw, cap=512):
    for t in (cap, 256, 128):
        if hw % t == 0:
            return t
    return hw  # full extent fallback (still a legal block)


def metasr_forward(params, x, inp, scale):
    bs, c, h, w = x.shape
    H_out, W_out = inp.shape[2], inp.shape[3]
    HW = H_out * W_out
    E = params["wr"].shape[0]
    c8 = params["weight_compress"].shape[1]

    p_tile = _pick_pixel_tile(HW)
    grid = (bs, HW // p_tile)
    cparams = pltpu.CompilerParams(dimension_semantics=("parallel", "parallel"))

    inp_flat = inp.reshape(bs, 4, HW)

    # --- kernel 1: embedding MLP + routing/offset heads (pixel tiles on lanes) ----
    routing, offset = pl.pallas_call(
        _embed_heads_kernel,
        out_shape=(jax.ShapeDtypeStruct((bs, E, HW), jnp.float32),
                   jax.ShapeDtypeStruct((bs, 2, HW), jnp.float32)),
        grid=grid,
        in_specs=[
            pl.BlockSpec((None, 4, p_tile), lambda b, t: (b, 0, t)),
            pl.BlockSpec(params["w1"].shape, lambda b, t: (0, 0)),
            pl.BlockSpec(params["b1"].shape, lambda b, t: (0, 0)),
            pl.BlockSpec(params["w2"].shape, lambda b, t: (0, 0)),
            pl.BlockSpec(params["b2"].shape, lambda b, t: (0, 0)),
            pl.BlockSpec(params["wr"].shape, lambda b, t: (0, 0)),
            pl.BlockSpec(params["br"].shape, lambda b, t: (0, 0)),
            pl.BlockSpec(params["wo"].shape, lambda b, t: (0, 0)),
            pl.BlockSpec(params["bo"].shape, lambda b, t: (0, 0)),
        ],
        out_specs=(pl.BlockSpec((None, E, p_tile), lambda b, t: (b, 0, t)),
                   pl.BlockSpec((None, 2, p_tile), lambda b, t: (b, 0, t))),
        compiler_params=cparams,
    )(inp_flat, params["w1"], params["b1"], params["w2"], params["b2"],
      params["wr"], params["br"], params["wo"], params["bo"])

    # TODO(synk): data-dependent bilinear gather (F.grid_sample) stays in plain JAX/XLA.
    fea0 = grid_sample_bilinear(x, offset.reshape(bs, 2, H_out, W_out), scale)

    # --- kernel 2: expert-gated compress->expand dynamic conv + residual ----------
    wc2d = params["weight_compress"].reshape(E * c8, c)
    we2d = params["weight_expand"].reshape(E * c, c8)

    out = pl.pallas_call(
        _moe_dynconv_kernel,
        out_shape=jax.ShapeDtypeStruct((bs, c, HW), x.dtype),
        grid=grid,
        in_specs=[
            pl.BlockSpec((None, c, p_tile), lambda b, t: (b, 0, t)),
            pl.BlockSpec((None, E, p_tile), lambda b, t: (b, 0, t)),
            pl.BlockSpec(wc2d.shape, lambda b, t: (0, 0)),
            pl.BlockSpec(we2d.shape, lambda b, t: (0, 0)),
        ],
        out_specs=pl.BlockSpec((None, c, p_tile), lambda b, t: (b, 0, t)),
        compiler_params=cparams,
    )(fea0.reshape(bs, c, HW), routing, wc2d, we2d)

    return out.reshape(bs, c, H_out, W_out)


# ----------------------------------------------------------------------------
# Plain-JAX reference (mirrors the PyTorch forward) for validation
# ----------------------------------------------------------------------------
def _reference_forward(params, x, inp, scale):
    bs, c, h, w = x.shape
    H_out, W_out = inp.shape[2], inp.shape[3]
    E = params["wr"].shape[0]
    c8 = params["weight_compress"].shape[1]

    def conv1x1(t, wgt, bias):
        return jnp.einsum("oc,bchw->bohw", wgt, t) + bias.reshape(1, -1, 1, 1)

    h1 = jnp.maximum(conv1x1(inp, params["w1"], params["b1"]), 0.0)
    h2 = jnp.maximum(conv1x1(h1, params["w2"], params["b2"]), 0.0)
    routing = jax.nn.sigmoid(conv1x1(h2, params["wr"], params["br"]))
    offset = conv1x1(h2, params["wo"], params["bo"])
    fea0 = grid_sample_bilinear(x, offset, scale)

    P = H_out * W_out
    rw = routing.reshape(bs, E, P).transpose(0, 2, 1)                        # (bs, P, E)
    wcp = (rw @ params["weight_compress"].reshape(E, -1)).reshape(bs, H_out, W_out, c8, c)
    wep = (rw @ params["weight_expand"].reshape(E, -1)).reshape(bs, H_out, W_out, c, c8)
    fea = fea0.transpose(0, 2, 3, 1)[..., None]                              # (bs,H,W,c,1)
    out = jnp.matmul(wep, jnp.matmul(wcp, fea))[..., 0]                      # (bs,H,W,c)
    return out.transpose(0, 3, 1, 2) + fea0


if __name__ == "__main__":
    key = jax.random.PRNGKey(0)
    pkey, xkey, rkey = jax.random.split(key, 3)

    B, C, H, W = 2, 16, 16, 16          # channels must be a multiple of 8 (channels//8 experts path)
    SCALE = 2.0                          # -> 32x32 output grid

    params = init_params(pkey, channels=C)
    x = jax.random.normal(xkey, (B, C, H, W), jnp.float32)
    # torch.rand(...) inside the PyTorch forward -> drawn once here and shared with the reference.
    inp = build_coord_input(rkey, B, H, W, SCALE)

    out = jax.block_until_ready(metasr_forward(params, x, inp, SCALE))
    ref = jax.block_until_ready(_reference_forward(params, x, inp, SCALE))

    assert out.shape == (B, C, round(SCALE * H), round(SCALE * W)), out.shape
    max_err = float(jnp.max(jnp.abs(out - ref)))
    assert jnp.allclose(out, ref, atol=1e-3, rtol=1e-3), max_err

    print("KERNEL_OK")
</pallas_src>

<mosaic_0001>
module attributes {stable_mosaic.version = 11 : i64} {
  func.func @_embed_heads_kernel(%arg0: i32, %arg1: i32, %arg2: memref<1x4x512xf32, #tpu.memory_space<vmem>>, %arg3: memref<64x4xf32, #tpu.memory_space<vmem>>, %arg4: memref<64x1xf32, #tpu.memory_space<vmem>>, %arg5: memref<64x64xf32, #tpu.memory_space<vmem>>, %arg6: memref<64x1xf32, #tpu.memory_space<vmem>>, %arg7: memref<4x64xf32, #tpu.memory_space<vmem>>, %arg8: memref<4x1xf32, #tpu.memory_space<vmem>>, %arg9: memref<2x64xf32, #tpu.memory_space<vmem>>, %arg10: memref<2x1xf32, #tpu.memory_space<vmem>>, %arg11: memref<1x4x512xf32, #tpu.memory_space<vmem>>, %arg12: memref<1x2x512xf32, #tpu.memory_space<vmem>>) attributes {dimension_semantics = [#tpu.dimension_semantics<parallel>, #tpu.dimension_semantics<parallel>], iteration_bounds = array<i64: 2, 2>, scalar_prefetch = 0 : i64, scratch_operands = 0 : i64, tpu.core_type = #tpu.core_type<tc>, window_params = [{transform_indices = @transform_0, window_bounds = array<i64: 1, 4, 512>}, {pipeline_mode = #tpu.pipeline_mode<synchronous>, transform_indices = @transform_1, window_bounds = array<i64: 64, 4>}, {pipeline_mode = #tpu.pipeline_mode<synchronous>, transform_indices = @transform_2, window_bounds = array<i64: 64, 1>}, {pipeline_mode = #tpu.pipeline_mode<synchronous>, transform_indices = @transform_3, window_bounds = array<i64: 64, 64>}, {pipeline_mode = #tpu.pipeline_mode<synchronous>, transform_indices = @transform_4, window_bounds = array<i64: 64, 1>}, {pipeline_mode = #tpu.pipeline_mode<synchronous>, transform_indices = @transform_5, window_bounds = array<i64: 4, 64>}, {pipeline_mode = #tpu.pipeline_mode<synchronous>, transform_indices = @transform_6, window_bounds = array<i64: 4, 1>}, {pipeline_mode = #tpu.pipeline_mode<synchronous>, transform_indices = @transform_7, window_bounds = array<i64: 2, 64>}, {pipeline_mode = #tpu.pipeline_mode<synchronous>, transform_indices = @transform_8, window_bounds = array<i64: 2, 1>}, {transform_indices = @transform_9, window_bounds = array<i64: 1, 4, 512>}, {transform_indices = @transform_10, window_bounds = array<i64: 1, 2, 512>}]} {
    %c0 = arith.constant 0 : index
    %c0_0 = arith.constant 0 : index
    %c0_1 = arith.constant 0 : index
    %0 = vector.load %arg2[%c0, %c0_0, %c0_1] : memref<1x4x512xf32, #tpu.memory_space<vmem>>, vector<1x4x512xf32>
    %1 = vector.shape_cast %0 : vector<1x4x512xf32> to vector<4x512xf32>
    %c0_2 = arith.constant 0 : index
    %c0_3 = arith.constant 0 : index
    %2 = vector.load %arg3[%c0_2, %c0_3] : memref<64x4xf32, #tpu.memory_space<vmem>>, vector<64x4xf32>
    %cst = arith.constant dense<0.000000e+00> : vector<64x512xf32>
    %3 = tpu.matmul %2, %1, %cst {dimension_numbers = #tpu.dot_dimension_numbers<[1], [0], [0], [1], [0, 0, 1, 1], [], []>} : vector<64x4xf32>, vector<4x512xf32>, vector<64x512xf32> -> vector<64x512xf32>
    %c0_4 = arith.constant 0 : index
    %c0_5 = arith.constant 0 : index
    %4 = vector.load %arg4[%c0_4, %c0_5] : memref<64x1xf32, #tpu.memory_space<vmem>>, vector<64x1xf32>
    %5 = vector.broadcast %4 : vector<64x1xf32> to vector<64x512xf32>
    %6 = arith.addf %3, %5 : vector<64x512xf32>
    %cst_6 = arith.constant 0.000000e+00 : f32
    %7 = vector.broadcast %cst_6 : f32 to vector<64x512xf32>
    %8 = arith.maximumf %6, %7 : vector<64x512xf32>
    %c0_7 = arith.constant 0 : index
    %c0_8 = arith.constant 0 : index
    %9 = vector.load %arg5[%c0_7, %c0_8] : memref<64x64xf32, #tpu.memory_space<vmem>>, vector<64x64xf32>
    %cst_9 = arith.constant dense<0.000000e+00> : vector<64x512xf32>
    %10 = tpu.matmul %9, %8, %cst_9 {dimension_numbers = #tpu.dot_dimension_numbers<[1], [0], [0], [1], [0, 0, 1, 1], [], []>} : vector<64x64xf32>, vector<64x512xf32>, vector<64x512xf32> -> vector<64x512xf32>
    %c0_10 = arith.constant 0 : index
    %c0_11 = arith.constant 0 : index
    %11 = vector.load %arg6[%c0_10, %c0_11] : memref<64x1xf32, #tpu.memory_space<vmem>>, vector<64x1xf32>
    %12 = vector.broadcast %11 : vector<64x1xf32> to vector<64x512xf32>
    %13 = arith.addf %10, %12 : vector<64x512xf32>
    %cst_12 = arith.constant 0.000000e+00 : f32
    %14 = vector.broadcast %cst_12 : f32 to vector<64x512xf32>
    %15 = arith.maximumf %13, %14 : vector<64x512xf32>
    %c0_13 = arith.constant 0 : index
    %c0_14 = arith.constant 0 : index
    %16 = vector.load %arg7[%c0_13, %c0_14] : memref<4x64xf32, #tpu.memory_space<vmem>>, vector<4x64xf32>
    %cst_15 = arith.constant dense<0.000000e+00> : vector<4x512xf32>
    %17 = tpu.matmul %16, %15, %cst_15 {dimension_numbers = #tpu.dot_dimension_numbers<[1], [0], [0], [1], [0, 0, 1, 1], [], []>} : vector<4x64xf32>, vector<64x512xf32>, vector<4x512xf32> -> vector<4x512xf32>
    %c0_16 = arith.constant 0 : index
    %c0_17 = arith.constant 0 : index
    %18 = vector.load %arg8[%c0_16, %c0_17] : memref<4x1xf32, #tpu.memory_space<vmem>>, vector<4x1xf32>
    %19 = vector.broadcast %18 : vector<4x1xf32> to vector<4x512xf32>
    %20 = arith.addf %17, %19 : vector<4x512xf32>
    %cst_18 = arith.constant 0.000000e+00 : f32
    %21 = vector.broadcast %cst_18 : f32 to vector<4x512xf32>
    %22 = arith.subf %21, %20 : vector<4x512xf32>
    %23 = math.exp %22 : vector<4x512xf32>
    %cst_19 = arith.constant 1.000000e+00 : f32
    %24 = vector.broadcast %cst_19 : f32 to vector<4x512xf32>
    %25 = arith.addf %24, %23 : vector<4x512xf32>
    %cst_20 = arith.constant 1.000000e+00 : f32
    %26 = vector.broadcast %cst_20 : f32 to vector<4x512xf32>
    %27 = arith.divf %26, %25 : vector<4x512xf32>
    %c0_21 = arith.constant 0 : index
    %c0_22 = arith.constant 0 : index
    %c0_23 = arith.constant 0 : index
    %28 = vector.load %arg11[%c0_21, %c0_22, %c0_23] : memref<1x4x512xf32, #tpu.memory_space<vmem>>, vector<1x4x512xf32>
    %29 = vector.shape_cast %28 : vector<1x4x512xf32> to vector<4x512xf32>
    %30 = vector.shape_cast %27 : vector<4x512xf32> to vector<1x4x512xf32>
    tpu.vector_store %arg11[%c0_21, %c0_22, %c0_23], %30 {strides = array<i32>} : memref<1x4x512xf32, #tpu.memory_space<vmem>>, vector<1x4x512xf32>,
    %c0_24 = arith.constant 0 : index
    %c0_25 = arith.constant 0 : index
    %31 = vector.load %arg9[%c0_24, %c0_25] : memref<2x64xf32, #tpu.memory_space<vmem>>, vector<2x64xf32>
    %cst_26 = arith.constant dense<0.000000e+00> : vector<2x512xf32>
    %32 = tpu.matmul %31, %15, %cst_26 {dimension_numbers = #tpu.dot_dimension_numbers<[1], [0], [0], [1], [0, 0, 1, 1], [], []>} : vector<2x64xf32>, vector<64x512xf32>, vector<2x512xf32> -> vector<2x512xf32>
    %c0_27 = arith.constant 0 : index
    %c0_28 = arith.constant 0 : index
    %33 = vector.load %arg10[%c0_27, %c0_28] : memref<2x1xf32, #tpu.memory_space<vmem>>, vector<2x1xf32>
    %34 = vector.broadcast %33 : vector<2x1xf32> to vector<2x512xf32>
    %35 = arith.addf %32, %34 : vector<2x512xf32>
    %c0_29 = arith.constant 0 : index
    %c0_30 = arith.constant 0 : index
    %c0_31 = arith.constant 0 : index
    %36 = vector.load %arg12[%c0_29, %c0_30, %c0_31] : memref<1x2x512xf32, #tpu.memory_space<vmem>>, vector<1x2x512xf32>
    %37 = vector.shape_cast %36 : vector<1x2x512xf32> to vector<2x512xf32>
    %38 = vector.shape_cast %35 : vector<2x512xf32> to vector<1x2x512xf32>
    tpu.vector_store %arg12[%c0_29, %c0_30, %c0_31], %38 {strides = array<i32>} : memref<1x2x512xf32, #tpu.memory_space<vmem>>, vector<1x2x512xf32>,
    return
  }
  func.func @transform_0(%arg0: i32, %arg1: i32) -> (i32, i32, i32) {
    %c0_i32 = arith.constant 0 : i32
    %c0_i32_0 = arith.constant 0 : i32
    return %arg0, %c0_i32, %arg1 : i32, i32, i32
  }
  func.func @transform_1(%arg0: i32, %arg1: i32) -> (i32, i32) {
    %c0_i32 = arith.constant 0 : i32
    %c0_i32_0 = arith.constant 0 : i32
    %c0_i32_1 = arith.constant 0 : i32
    return %c0_i32, %c0_i32_0 : i32, i32
  }
  func.func @transform_2(%arg0: i32, %arg1: i32) -> (i32, i32) {
    %c0_i32 = arith.constant 0 : i32
    %c0_i32_0 = arith.constant 0 : i32
    %c0_i32_1 = arith.constant 0 : i32
    return %c0_i32, %c0_i32_0 : i32, i32
  }
  func.func @transform_3(%arg0: i32, %arg1: i32) -> (i32, i32) {
    %c0_i32 = arith.constant 0 : i32
    %c0_i32_0 = arith.constant 0 : i32
    %c0_i32_1 = arith.constant 0 : i32
    return %c0_i32, %c0_i32_0 : i32, i32
  }
  func.func @transform_4(%arg0: i32, %arg1: i32) -> (i32, i32) {
    %c0_i32 = arith.constant 0 : i32
    %c0_i32_0 = arith.constant 0 : i32
    %c0_i32_1 = arith.constant 0 : i32
    return %c0_i32, %c0_i32_0 : i32, i32
  }
  func.func @transform_5(%arg0: i32, %arg1: i32) -> (i32, i32) {
    %c0_i32 = arith.constant 0 : i32
    %c0_i32_0 = arith.constant 0 : i32
    %c0_i32_1 = arith.constant 0 : i32
    return %c0_i32, %c0_i32_0 : i32, i32
  }
  func.func @transform_6(%arg0: i32, %arg1: i32) -> (i32, i32) {
    %c0_i32 = arith.constant 0 : i32
    %c0_i32_0 = arith.constant 0 : i32
    %c0_i32_1 = arith.constant 0 : i32
    return %c0_i32, %c0_i32_0 : i32, i32
  }
  func.func @transform_7(%arg0: i32, %arg1: i32) -> (i32, i32) {
    %c0_i32 = arith.constant 0 : i32
    %c0_i32_0 = arith.constant 0 : i32
    %c0_i32_1 = arith.constant 0 : i32
    return %c0_i32, %c0_i32_0 : i32, i32
  }
  func.func @transform_8(%arg0: i32, %arg1: i32) -> (i32, i32) {
    %c0_i32 = arith.constant 0 : i32
    %c0_i32_0 = arith.constant 0 : i32
    %c0_i32_1 = arith.constant 0 : i32
    return %c0_i32, %c0_i32_0 : i32, i32
  }
  func.func @transform_9(%arg0: i32, %arg1: i32) -> (i32, i32, i32) {
    %c0_i32 = arith.constant 0 : i32
    %c0_i32_0 = arith.constant 0 : i32
    return %arg0, %c0_i32, %arg1 : i32, i32, i32
  }
  func.func @transform_10(%arg0: i32, %arg1: i32) -> (i32, i32, i32) {
    %c0_i32 = arith.constant 0 : i32
    %c0_i32_0 = arith.constant 0 : i32
    return %arg0, %c0_i32, %arg1 : i32, i32, i32
  }
}

</mosaic_0001>

<llo_original>
// kernel: tpu_custom_call.1
$region0: #{tpu_custom_call.1}
  #allocation0 [shape = 'u32[]', space=smem, size = 0x4, offset = 0x4, fixed_abs, tag = 'smem constant byte address 0x4 - core index']
  #allocation1 [shape = 'u32[144,128]{1,0:T(1,128)}', space=vmem, size = 0x12000, scoped, tag = 'internal scratch']
  %s0 = inlined_call_operand.vmem [shape: f32[2,4,1024], index: 0, kind: input, shape index: {}]
  %s1 = inlined_call_operand.vmem [shape: f32[64,4], index: 1, kind: input, shape index: {}]
  %s2 = inlined_call_operand.vmem [shape: f32[64,1], index: 2, kind: input, shape index: {}]
  %s3 = inlined_call_operand.vmem [shape: f32[64,64], index: 3, kind: input, shape index: {}]
  %s4 = inlined_call_operand.vmem [shape: f32[64,1], index: 4, kind: input, shape index: {}]
  %s5 = inlined_call_operand.vmem [shape: f32[4,64], index: 5, kind: input, shape index: {}]
  %s6 = inlined_call_operand.vmem [shape: f32[4,1], index: 6, kind: input, shape index: {}]
  %s7 = inlined_call_operand.vmem [shape: f32[2,64], index: 7, kind: input, shape index: {}]
  %s8 = inlined_call_operand.vmem [shape: f32[2,1], index: 8, kind: input, shape index: {}]
  %s9 = inlined_call_operand.hbm [shape: f32[2,4,1024], index: 9, kind: output, shape index: {0}]
  %s10 = inlined_call_operand.hbm [shape: f32[2,2,1024], index: 10, kind: output, shape index: {1}]
  %11 = xla_tuple %s9, %s10
  %s12 = sld [smem:[#allocation0]]
  $region77: #{tpu_custom_call.1} parent=0
    _
  %s14 = ssub.s32 1, %s12
  %s15 = scalar_select 0, %s14, %s12
  $region1: #{tpu_custom_call.1} parent=0
    #allocation2 [shape = 'u8[16384]{0}', space=vmem, size = 0x4000, scoped, tag = 'output window, operand 0']
    #allocation3 [shape = 's32[2]{0}', space=sflag, size = 0x8, scoped, tag = 'scoped memory for tpu_custom_call.1']
    #allocation4 [shape = 'u8[8192]{0}', space=vmem, size = 0x2000, scoped, tag = 'output window, operand 1']
    #allocation5 [shape = 's32[2]{0}', space=sflag, size = 0x8, scoped, tag = 'scoped memory for tpu_custom_call.1']
    %16 = vsyncpa [#allocation3], 0
    %s17 = scalar_lea.sflag [#allocation3], 1
    %18 = vsyncpa %s17, 0
    %19 = vsyncpa [#allocation5], 0
    %s20 = scalar_lea.sflag [#allocation5], 1
    %21 = vsyncpa %s20, 0
    loop: start=0, step=1, limit=6
    $region2: #{tpu_custom_call.1} parent=1 // loop_pre_header
      _
    $region3: #{tpu_custom_call.1} parent=1 // loop_header
      %s23 = sphi 0, %s27
      %p24 = scmp.ge.s32.totalorder %s23, 6
      %s30 = sphi 0, %s42
      %s31 = sphi 0, %s38
      %s32 = sphi 0, %s30
      %s33 = sphi 0, %s31
      %s34 = sphi 0, %s32
      %s35 = sphi 0, %s33
      %s47 = sphi 0, %s49
      %s50 = sphi 0, %s47
      %s51 = sphi 0, %s50
      %s67 = sphi 0, %s51
      %s71 = sphi 0, %s71
      %s73 = sphi 0, %s71
      %s74 = sphi 0, %s73
      %s88 = sphi 0, %s74
      %s92 = sphi 0, %s92
      %s94 = sphi 0, %s92
      %s95 = sphi 0, %s94
      %s109 = sphi 0, %s95
      %s113 = sphi 0, %s113
      %s115 = sphi 0, %s113
      %s116 = sphi 0, %s115
      %s130 = sphi 0, %s116
      %s134 = sphi 0, %s134
      %s136 = sphi 0, %s134
      %s137 = sphi 0, %s136
      %s151 = sphi 0, %s137
      %s155 = sphi 0, %s155
      %s157 = sphi 0, %s155
      %s158 = sphi 0, %s157
      %s172 = sphi 0, %s158
      %s176 = sphi 0, %s176
      %s178 = sphi 0, %s176
      %s179 = sphi 0, %s178
      %s193 = sphi 0, %s179
      %s197 = sphi 0, %s197
      %s199 = sphi 0, %s197
      %s200 = sphi 0, %s199
      %s214 = sphi 0, %s200
      %s218 = sphi 0, %s218
      %s220 = sphi 0, %s218
      %s221 = sphi 0, %s220
      %s235 = sphi 0, %s221
      %s243 = sphi 0, %s245
      %s246 = sphi 0, %s243
      %s247 = sphi 0, %s246
      %s263 = sphi 0, %s247
      %s271 = sphi 0, %s273
      %s274 = sphi 0, %s271
      %s275 = sphi 0, %s274
      %s291 = sphi 0, %s275
    $region4: #{tpu_custom_call.1} parent=1 // loop_header_branch
      %26 = sbr.rel (%p24) target = $region8
    $region5: #{tpu_custom_call.1} parent=1 // loop_body
      %s28 = ssub.s32 %s23, 1
      %s29 = ssub.s32 %s23, 2
      %s36 = sadd.s32 1, %s31
      %p37 = scmp.ge.s32.totalorder %s36, 2
      %s38 = scalar_select %p37, 0, %s36
      %s39 = sadd.s32 1, %s30
      %s40 = scalar_select %p37, %s39, %s30
      %p41 = scmp.ge.s32.totalorder %s40, 2
      %s42 = scalar_select %p41, 0, %s40
      %s43 = ssub.s32 %s30, %s42
      %s44 = ssub.s32 %s31, %s38
      %s45 = sor.u32 %s43, %s44
      %p46 = scmp.eq.s32.totalorder %s45, 0
      %s48 = sadd.s32 %s47, 1
      %s49 = scalar_select %p46, %s47, %s48
      %p52 = pneg %p46
      %p53 = scmp.eq.s32.totalorder %s23, 3
      %p54 = por %p52, %p53
      %p55 = scmp.ne.s32.totalorder %s47, %s50
      %p56 = scmp.eq.s32.totalorder %s23, 0
      %p57 = por %p55, %p56
      %p58 = scmp.ne.s32.totalorder %s47, %s50
      %p59 = scmp.eq.s32.totalorder %s28, 3
      %p60 = por %p58, %p59
      %p61 = scmp.ne.s32.totalorder %s50, %s51
      %p62 = scmp.eq.s32.totalorder %s28, 0
      %p63 = por %p61, %p62
      %p64 = scmp.ne.s32.totalorder %s50, %s51
      %p65 = scmp.eq.s32.totalorder %s29, 3
      %p66 = por %p64, %p65
      %p68 = scmp.ne.s32.totalorder %s51, %s67
      %p69 = scmp.eq.s32.totalorder %s29, 0
      %p70 = por %p68, %p69
      %s72 = sadd.s32 %s71, 1
      %p75 = scmp.eq.s32.totalorder %s23, 3
      %p76 = scmp.ne.s32.totalorder %s71, %s73
      %p77 = scmp.eq.s32.totalorder %s23, 0
      %p78 = por %p76, %p77
      %p79 = scmp.ne.s32.totalorder %s71, %s73
      %p80 = scmp.eq.s32.totalorder %s28, 3
      %p81 = por %p79, %p80
      %p82 = scmp.ne.s32.totalorder %s73, %s74
      %p83 = scmp.eq.s32.totalorder %s28, 0
      %p84 = por %p82, %p83
      %p85 = scmp.ne.s32.totalorder %s73, %s74
      %p86 = scmp.eq.s32.totalorder %s29, 3
      %p87 = por %p85, %p86
      %p89 = scmp.ne.s32.totalorder %s74, %s88
      %p90 = scmp.eq.s32.totalorder %s29, 0
      %p91 = por %p89, %p90
      %s93 = sadd.s32 %s92, 1
      %p96 = scmp.eq.s32.totalorder %s23, 3
      %p97 = scmp.ne.s32.totalorder %s92, %s94
      %p98 = scmp.eq.s32.totalorder %s23, 0
      %p99 = por %p97, %p98
      %p100 = scmp.ne.s32.totalorder %s92, %s94
      %p101 = scmp.eq.s32.totalorder %s28, 3
      %p102 = por %p100, %p101
      %p103 = scmp.ne.s32.totalorder %s94, %s95
      %p104 = scmp.eq.s32.totalorder %s28, 0
      %p105 = por %p103, %p104
      %p106 = scmp.ne.s32.totalorder %s94, %s95
      %p107 = scmp.eq.s32.totalorder %s29, 3
      %p108 = por %p106, %p107
      %p110 = scmp.ne.s32.totalorder %s95, %s109
      %p111 = scmp.eq.s32.totalorder %s29, 0
      %p112 = por %p110, %p111
      %s114 = sadd.s32 %s113, 1
      %p117 = scmp.eq.s32.totalorder %s23, 3
      %p118 = scmp.ne.s32.totalorder %s113, %s115
      %p119 = scmp.eq.s32.totalorder %s23, 0
      %p120 = por %p118, %p119
      %p121 = scmp.ne.s32.totalorder %s113, %s115
      %p122 = scmp.eq.s32.totalorder %s28, 3
      %p123 = por %p121, %p122
      %p124 = scmp.ne.s32.totalorder %s115, %s116
      %p125 = scmp.eq.s32.totalorder %s28, 0
      %p126 = por %p124, %p125
      %p127 = scmp.ne.s32.totalorder %s115, %s116
      %p128 = scmp.eq.s32.totalorder %s29, 3
      %p129 = por %p127, %p128
      %p131 = scmp.ne.s32.totalorder %s116, %s130
      %p132 = scmp.eq.s32.totalorder %s29, 0
      %p133 = por %p131, %p132
      %s135 = sadd.s32 %s134, 1
      %p138 = scmp.eq.s32.totalorder %s23, 3
      %p139 = scmp.ne.s32.totalorder %s134, %s136
      %p140 = scmp.eq.s32.totalorder %s23, 0
      %p141 = por %p139, %p140
      %p142 = scmp.ne.s32.totalorder %s134, %s136
      %p143 = scmp.eq.s32.totalorder %s28, 3
      %p144 = por %p142, %p143
      %p145 = scmp.ne.s32.totalorder %s136, %s137
      %p146 = scmp.eq.s32.totalorder %s28, 0
      %p147 = por %p145, %p146
      %p148 = scmp.ne.s32.totalorder %s136, %s137
      %p149 = scmp.eq.s32.totalorder %s29, 3
      %p150 = por %p148, %p149
      %p152 = scmp.ne.s32.totalorder %s137, %s151
      %p153 = scmp.eq.s32.totalorder %s29, 0
      %p154 = por %p152, %p153
      %s156 = sadd.s32 %s155, 1
      %p159 = scmp.eq.s32.totalorder %s23, 3
      %p160 = scmp.ne.s32.totalorder %s155, %s157
      %p161 = scmp.eq.s32.totalorder %s23, 0
      %p162 = por %p160, %p161
      %p163 = scmp.ne.s32.totalorder %s155, %s157
      %p164 = scmp.eq.s32.totalorder %s28, 3
      %p165 = por %p163, %p164
      %p166 = scmp.ne.s32.totalorder %s157, %s158
      %p167 = scmp.eq.s32.totalorder %s28, 0
      %p168 = por %p166, %p167
      %p169 = scmp.ne.s32.totalorder %s157, %s158
      %p170 = scmp.eq.s32.totalorder %s29, 3
      %p171 = por %p169, %p170
      %p173 = scmp.ne.s32.totalorder %s158, %s172
      %p174 = scmp.eq.s32.totalorder %s29, 0
      %p175 = por %p173, %p174
      %s177 = sadd.s32 %s176, 1
      %p180 = scmp.eq.s32.totalorder %s23, 3
      %p181 = scmp.ne.s32.totalorder %s176, %s178
      %p182 = scmp.eq.s32.totalorder %s23, 0
      %p183 = por %p181, %p182
      %p184 = scmp.ne.s32.totalorder %s176, %s178
      %p185 = scmp.eq.s32.totalorder %s28, 3
      %p186 = por %p184, %p185
      %p187 = scmp.ne.s32.totalorder %s178, %s179
      %p188 = scmp.eq.s32.totalorder %s28, 0
      %p189 = por %p187, %p188
      %p190 = scmp.ne.s32.totalorder %s178, %s179
      %p191 = scmp.eq.s32.totalorder %s29, 3
      %p192 = por %p190, %p191
      %p194 = scmp.ne.s32.totalorder %s179, %s193
      %p195 = scmp.eq.s32.totalorder %s29, 0
      %p196 = por %p194, %p195
      %s198 = sadd.s32 %s197, 1
      %p201 = scmp.eq.s32.totalorder %s23, 3
      %p202 = scmp.ne.s32.totalorder %s197, %s199
      %p203 = scmp.eq.s32.totalorder %s23, 0
      %p204 = por %p202, %p203
      %p205 = scmp.ne.s32.totalorder %s197, %s199
      %p206 = scmp.eq.s32.totalorder %s28, 3
      %p207 = por %p205, %p206
      %p208 = scmp.ne.s32.totalorder %s199, %s200
      %p209 = scmp.eq.s32.totalorder %s28, 0
      %p210 = por %p208, %p209
      %p211 = scmp.ne.s32.totalorder %s199, %s200
      %p212 = scmp.eq.s32.totalorder %s29, 3
      %p213 = por %p211, %p212
      %p215 = scmp.ne.s32.totalorder %s200, %s214
      %p216 = scmp.eq.s32.totalorder %s29, 0
      %p217 = por %p215, %p216
      %s219 = sadd.s32 %s218, 1
      %p222 = scmp.eq.s32.totalorder %s23, 3
      %p223 = scmp.ne.s32.totalorder %s218, %s220
      %p224 = scmp.eq.s32.totalorder %s23, 0
      %p225 = por %p223, %p224
      %p226 = scmp.ne.s32.totalorder %s218, %s220
      %p227 = scmp.eq.s32.totalorder %s28, 3
      %p228 = por %p226, %p227
      %p229 = scmp.ne.s32.totalorder %s220, %s221
      %p230 = scmp.eq.s32.totalorder %s28, 0
      %p231 = por %p229, %p230
      %p232 = scmp.ne.s32.totalorder %s220, %s221
      %p233 = scmp.eq.s32.totalorder %s29, 3
      %p234 = por %p232, %p233
      %p236 = scmp.ne.s32.totalorder %s221, %s235
      %p237 = scmp.eq.s32.totalorder %s29, 0
      %p238 = por %p236, %p237
      %s239 = ssub.s32 %s30, %s42
      %s240 = ssub.s32 %s31, %s38
      %s241 = sor.u32 %s239, %s240
      %p242 = scmp.eq.s32.totalorder %s241, 0
      %s244 = sadd.s32 %s243, 1
      %s245 = scalar_select %p242, %s243, %s244
      %p248 = pneg %p242
      %p249 = scmp.eq.s32.totalorder %s23, 3
      %p250 = por %p248, %p249
      %p251 = scmp.ne.s32.totalorder %s243, %s246
      %p252 = scmp.eq.s32.totalorder %s23, 0
      %p253 = por %p251, %p252
      %p254 = scmp.ne.s32.totalorder %s243, %s246
      %p255 = scmp.eq.s32.totalorder %s28, 3
      %p256 = por %p254, %p255
      %p257 = scmp.ne.s32.totalorder %s246, %s247
      %p258 = scmp.eq.s32.totalorder %s28, 0
      %p259 = por %p257, %p258
      %p260 = scmp.ne.s32.totalorder %s246, %s247
      %p261 = scmp.eq.s32.totalorder %s29, 3
      %p262 = por %p260, %p261
      %p264 = scmp.ne.s32.totalorder %s247, %s263
      %p265 = scmp.eq.s32.totalorder %s29, 0
      %p266 = por %p264, %p265
      %s267 = ssub.s32 %s30, %s42
      %s268 = ssub.s32 %s31, %s38
      %s269 = sor.u32 %s267, %s268
      %p270 = scmp.eq.s32.totalorder %s269, 0
      %s272 = sadd.s32 %s271, 1
      %s273 = scalar_select %p270, %s271, %s272
      %p276 = pneg %p270
      %p277 = scmp.eq.s32.totalorder %s23, 3
      %p278 = por %p276, %p277
      %p279 = scmp.ne.s32.totalorder %s271, %s274
      %p280 = scmp.eq.s32.totalorder %s23, 0
      %p281 = por %p279, %p280
      %p282 = scmp.ne.s32.totalorder %s271, %s274
      %p283 = scmp.eq.s32.totalorder %s28, 3
      %p284 = por %p282, %p283
      %p285 = scmp.ne.s32.totalorder %s274, %s275
      %p286 = scmp.eq.s32.totalorder %s28, 0
      %p287 = por %p285, %p286
      %p288 = scmp.ne.s32.totalorder %s274, %s275
      %p289 = scmp.eq.s32.totalorder %s29, 3
      %p290 = por %p288, %p289
      %p292 = scmp.ne.s32.totalorder %s275, %s291
      %p293 = scmp.eq.s32.totalorder %s29, 0
      %p294 = por %p292, %p293
      %p295 = scmp.le.s32.totalorder 1, %s23
      %p296 = scmp.lt.s32.totalorder %s23, 5
      %p297 = pnand %p295, %p296
      %p298 = pneg %p297
      // Predicated region
      $region9: #{tpu_custom_call.1} parent=5 // pred_check
        _
      $region10: #{tpu_custom_call.1} parent=5 // pred_check_branch
        %300 = sbr.rel (%p297) target = $region12
      $region11: #{tpu_custom_call.1} parent=5 // pred_region
        %s301 = ssub.s32 %s23, 1
        // Predicated region
        $region13: #{tpu_custom_call.1} parent=11 // pred_check
          %p302 = pneg %p84
        $region14: #{tpu_custom_call.1} parent=11 // pred_check_branch
          %304 = sbr.rel (%p302) target = $region16
        $region15: #{tpu_custom_call.1} parent=11 // pred_region
          _
        $region16: #{tpu_custom_call.1} parent=11 // pred_fallthru
          _
        // Predicated region
        $region17: #{tpu_custom_call.1} parent=11 // pred_check
          %p305 = pneg %p105
        $region18: #{tpu_custom_call.1} parent=11 // pred_check_branch
          %307 = sbr.rel (%p305) target = $region20
        $region19: #{tpu_custom_call.1} parent=11 // pred_region
          _
        $region20: #{tpu_custom_call.1} parent=11 // pred_fallthru
          _
        // Predicated region
        $region21: #{tpu_custom_call.1} parent=11 // pred_check
          %p308 = pneg %p126
        $region22: #{tpu_custom_call.1} parent=11 // pred_check_branch
          %310 = sbr.rel (%p308) target = $region24
        $region23: #{tpu_custom_call.1} parent=11 // pred_region
          _
        $region24: #{tpu_custom_call.1} parent=11 // pred_fallthru
          _
        // Predicated region
        $region25: #{tpu_custom_call.1} parent=11 // pred_check
          %p311 = pneg %p147
        $region26: #{tpu_custom_call.1} parent=11 // pred_check_branch
          %313 = sbr.rel (%p311) target = $region28
        $region27: #{tpu_custom_call.1} parent=11 // pred_region
          _
        $region28: #{tpu_custom_call.1} parent=11 // pred_fallthru
          _
        // Predicated region
        $region29: #{tpu_custom_call.1} parent=11 // pred_check
          %p314 = pneg %p168
        $region30: #{tpu_custom_call.1} parent=11 // pred_check_branch
          %316 = sbr.rel (%p314) target = $region32
        $region31: #{tpu_custom_call.1} parent=11 // pred_region
          _
        $region32: #{tpu_custom_call.1} parent=11 // pred_fallthru
          _
        // Predicated region
        $region33: #{tpu_custom_call.1} parent=11 // pred_check
          %p317 = pneg %p189
        $region34: #{tpu_custom_call.1} parent=11 // pred_check_branch
          %319 = sbr.rel (%p317) target = $region36
        $region35: #{tpu_custom_call.1} parent=11 // pred_region
          _
        $region36: #{tpu_custom_call.1} parent=11 // pred_fallthru
          _
        // Predicated region
        $region37: #{tpu_custom_call.1} parent=11 // pred_check
          %p320 = pneg %p210
        $region38: #{tpu_custom_call.1} parent=11 // pred_check_branch
          %322 = sbr.rel (%p320) target = $region40
        $region39: #{tpu_custom_call.1} parent=11 // pred_region
          _
        $region40: #{tpu_custom_call.1} parent=11 // pred_fallthru
          _
        // Predicated region
        $region41: #{tpu_custom_call.1} parent=11 // pred_check
          %p323 = pneg %p231
        $region42: #{tpu_custom_call.1} parent=11 // pred_check_branch
          %325 = sbr.rel (%p323) target = $region44
        $region43: #{tpu_custom_call.1} parent=11 // pred_region
          _
        $region44: #{tpu_custom_call.1} parent=11 // pred_fallthru
          _
      $region12: #{tpu_custom_call.1} parent=5 // pred_fallthru
        _
      %p326 = scmp.lt.s32.totalorder %s23, 4
      // Predicated region
      $region45: #{tpu_custom_call.1} parent=5 // pred_check
        %p327 = pneg %p326
      $region46: #{tpu_custom_call.1} parent=5 // pred_check_branch
        %329 = sbr.rel (%p327) target = $region48
      $region47: #{tpu_custom_call.1} parent=5 // pred_region
        // Predicated region
        $region49: #{tpu_custom_call.1} parent=47 // pred_check
          %p330 = pneg %p57
        $region50: #{tpu_custom_call.1} parent=47 // pred_check_branch
          %332 = sbr.rel (%p330) target = $region52
        $region51: #{tpu_custom_call.1} parent=47 // pred_region
          %s333 = smul.u32 4, %s31
          %p334 = scmp.lt.s32.totalorder %s30, 1
          %s335 = scalar_select %p334, %s30, 1
          %p336 = scmp.lt.s32.totalorder %s333, 7
          %s337 = scalar_select %p336, %s333, 7
          %s338 = smul.addr %s335, 8
          %s339 = sadd.s32 %s337, %s338
          %s340 = smul.addr %s339, 4
          %s341 = scalar_lea.vmem %s0, %s340
          %s342 = smul.u32 4, %s31
        $region52: #{tpu_custom_call.1} parent=47 // pred_fallthru
          _
      $region48: #{tpu_custom_call.1} parent=5 // pred_fallthru
        _
      %p343 = scmp.le.s32.totalorder 1, %s23
      %p344 = scmp.lt.s32.totalorder %s23, 5
      %p345 = pnand %p343, %p344
      %p346 = pneg %p345
      // Predicated region
      $region53: #{tpu_custom_call.1} parent=5 // pred_check
        _
      $region54: #{tpu_custom_call.1} parent=5 // pred_check_branch
        %348 = sbr.rel (%p345) target = $region56
      $region55: #{tpu_custom_call.1} parent=5 // pred_region
        %s349 = ssub.s32 %s23, 1
        %s350 = smul.u32 4, %s33
        %p351 = scmp.lt.s32.totalorder %s32, 1
        %s352 = scalar_select %p351, %s32, 1
        %p353 = scmp.lt.s32.totalorder %s350, 7
        %s354 = scalar_select %p353, %s350, 7
        %s355 = smul.addr %s352, 8
        %s356 = sadd.s32 %s354, %s355
        %s357 = smul.addr %s356, 4
        %s358 = scalar_lea.vmem %s0, %s357
        %p359 = pneg %p63
        %p360 = pneg %p60
        %p361 = pneg %p84
        %p362 = pneg %p81
        %p363 = pneg %p105
        %p364 = pneg %p102
        %p365 = pneg %p126
        %p366 = pneg %p123
        %p367 = pneg %p147
        %p368 = pneg %p144
        %p369 = pneg %p168
        %p370 = pneg %p165
        %p371 = pneg %p189
        %p372 = pneg %p186
        %p373 = pneg %p210
        %p374 = pneg %p207
        %p375 = pneg %p231
        %p376 = pneg %p228
        %p377 = pneg %p259
        %p378 = pneg %p256
        %s379 = sand.u32 %s246, 1
        %s380 = scalar_lea.sflag [#allocation3], %s379
        %s381 = sand.u32 %s246, 1
        %s382 = smul.addr %s381, 16
        %s383 = scalar_lea.vmem [#allocation2], %s382
        %p384 = pneg %p287
        %p385 = pneg %p284
        %s386 = sand.u32 %s274, 1
        %s387 = scalar_lea.sflag [#allocation5], %s386
        %s388 = sand.u32 %s274, 1
        %s389 = smul.addr %s388, 8
        %s390 = scalar_lea.vmem [#allocation4], %s389
        %s391 = smul.u32 4, %s33
        %p392 = scmp.lt.s32.totalorder %s32, 1
        %s393 = scalar_select %p392, %s32, 1
        %p394 = scmp.lt.s32.totalorder %s391, 7
        %s395 = scalar_select %p394, %s391, 7
        %s396 = smul.addr %s393, 8
        %s397 = sadd.s32 %s395, %s396
        %s398 = smul.addr %s397, 4
        %s399 = scalar_lea.vmem %s0, %s398
        %s400 = smul.u32 4, %s33
        %s401 = smul.u32 4, %s33
        %s402 = smul.u32 4, %s33
        %v403 = vld [vmem:[%s399] sm:$0xff]
        %v404 = vld [vmem:[%s399 + $0x8] sm:$0xff]
        %v405 = vld [vmem:[%s1] sm:$0xff]
        %v406 = vld [vmem:[%s1 + $0x8] sm:$0xff]
        %v407 = vld [vmem:[%s1 + $0x10] sm:$0xff]
        %v408 = vld [vmem:[%s1 + $0x18] sm:$0xff]
        %v409 = vld [vmem:[%s1 + $0x20] sm:$0xff]
        %v410 = vld [vmem:[%s1 + $0x28] sm:$0xff]
        %v411 = vld [vmem:[%s1 + $0x30] sm:$0xff]
        %v412 = vld [vmem:[%s1 + $0x38] sm:$0xff]
        %v413 = vld [vmem:[%s2] sm:$0xff]
        %v414 = vld [vmem:[%s2 + $0x8] sm:$0xff]
        %v415 = vld [vmem:[%s2 + $0x10] sm:$0xff]
        %v416 = vld [vmem:[%s2 + $0x18] sm:$0xff]
        %v417 = vld [vmem:[%s2 + $0x20] sm:$0xff]
        %v418 = vld [vmem:[%s2 + $0x28] sm:$0xff]
        %v419 = vld [vmem:[%s2 + $0x30] sm:$0xff]
        %v420 = vld [vmem:[%s2 + $0x38] sm:$0xff]
        %422 = vset.pattern.permute.xlu0 0
        %423 = vperm.xlu0 %422, %v413
        %v424 = vpop.permute.xlu0 %423
        %427 = vset.pattern.permute.xlu0 0
        %428 = vperm.xlu0 %427, %v414
        %v429 = vpop.permute.xlu0 %428
        %432 = vset.pattern.permute.xlu0 0
        %433 = vperm.xlu0 %432, %v415
        %v434 = vpop.permute.xlu0 %433
        %437 = vset.pattern.permute.xlu0 0
        %438 = vperm.xlu0 %437, %v416
        %v439 = vpop.permute.xlu0 %438
        %442 = vset.pattern.permute.xlu0 0
        %443 = vperm.xlu0 %442, %v417
        %v444 = vpop.permute.xlu0 %443
        %447 = vset.pattern.permute.xlu0 0
        %448 = vperm.xlu0 %447, %v418
        %v449 = vpop.permute.xlu0 %448
        %452 = vset.pattern.permute.xlu0 0
        %453 = vperm.xlu0 %452, %v419
        %v454 = vpop.permute.xlu0 %453
        %457 = vset.pattern.permute.xlu0 0
        %458 = vperm.xlu0 %457, %v420
        %v459 = vpop.permute.xlu0 %458
        %v463 = vcombine.high %v403, %v403
        %v464 = vcombine.high %v404, %v404
        %vm465 = vcmask 31744
        %v467 = vsel %vm465, %v405, 0
        %v470 = vsel %vm465, %v406, 0
        %v473 = vsel %vm465, %v407, 0
        %v476 = vsel %vm465, %v408, 0
        %v479 = vsel %vm465, %v409, 0
        %v482 = vsel %vm465, %v410, 0
        %v485 = vsel %vm465, %v411, 0
        %v488 = vsel %vm465, %v412, 0
        %vm490 = vcmask 1043456
        %v491 = vsel %vm490, %v403, 0
        %v493 = vsel %vm490, %v463, 0
        %v495 = vsel %vm490, %v404, 0
        %v497 = vsel %vm490, %v464, 0
        %499 = vmatprep.subr.mxu0 0.0
        %500 = vmatpush1.msra.mxu0 0.0
        %501 = vmatprep.subr.mxu0 0.0
        %502 = vmatpush1.msra.mxu0 0.0
        %503 = vmatprep.subr.mxu0 0.0
        %504 = vmatpush1.msra.mxu0 0.0
        %505 = vmatprep.subr.mxu0 0.0
        %506 = vmatpush1.msra.mxu0 0.0
        %507 = vmatprep.subr.mxu0 0.0
        %508 = vmatpush1.msra.mxu0 0.0
        %509 = vmatprep.subr.mxu0 0.0
        %510 = vmatpush1.msra.mxu0 0.0
        %511 = vmatprep.subr.mxu0 0.0
        %512 = vmatpush1.msra.mxu0 0.0
        %513 = vmatprep.subr.mxu0 0.0
        %514 = vmatpush1.msra.mxu0 0.0
        %515 = vmatprep.subr.mxu0 0.0
        %516 = vmatpush1.msra.mxu0 0.0
        %517 = vmatprep.subr.mxu0 0.0
        %518 = vmatpush1.msra.mxu0 0.0
        %519 = vmatprep.subr.mxu0 0.0
        %520 = vmatpush1.msra.mxu0 0.0
        %521 = vmatprep.subr.mxu0 0.0
        %522 = vmatpush1.msra.mxu0 0.0
        %523 = vmatprep.subr.mxu0 0.0
        %524 = vmatpush1.msra.mxu0 0.0
        %525 = vmatprep.subr.mxu0 0.0
        %526 = vmatpush1.msra.mxu0 0.0
        %527 = vmatprep.subr.mxu0 0.0
        %528 = vmatpush1.msra.mxu0 0.0
        %529 = vmatprep.subr.mxu0 %v493
        %530 = vmatpush1.msra.mxu0 %v491
        %531 = vmatprep.subr.mxu0 0.0
        %532 = vmatpush2.msra.mxu0 0.0
        %533 = vmatprep.subr.mxu0 0.0
        %534 = vmatpush2.msra.mxu0 0.0
        %535 = vmatprep.subr.mxu0 0.0
        %536 = vmatpush2.msra.mxu0 0.0
        %537 = vmatprep.subr.mxu0 0.0
        %538 = vmatpush2.msra.mxu0 0.0
        %539 = vmatprep.subr.mxu0 0.0
        %540 = vmatpush2.msra.mxu0 0.0
        %541 = vmatprep.subr.mxu0 0.0
        %542 = vmatpush2.msra.mxu0 0.0
        %543 = vmatprep.subr.mxu0 0.0
        %544 = vmatpush2.msra.mxu0 0.0
        %545 = vmatprep.subr.mxu0 0.0
        %546 = vmatpush2.msra.mxu0 0.0
        %547 = vmatprep.subr.mxu0 0.0
        %548 = vmatpush2.msra.mxu0 0.0
        %549 = vmatprep.subr.mxu0 0.0
        %550 = vmatpush2.msra.mxu0 0.0
        %551 = vmatprep.subr.mxu0 0.0
        %552 = vmatpush2.msra.mxu0 0.0
        %553 = vmatprep.subr.mxu0 0.0
        %554 = vmatpush2.msra.mxu0 0.0
        %555 = vmatprep.subr.mxu0 0.0
        %556 = vmatpush2.msra.mxu0 0.0
        %557 = vmatprep.subr.mxu0 0.0
        %558 = vmatpush2.msra.mxu0 0.0
        %559 = vmatprep.subr.mxu0 0.0
        %560 = vmatpush2.msra.mxu0 0.0
        %561 = vmatprep.subr.mxu0 0.0
        %562 = vmatpush2.msra.mxu0 0.0
        %563 = vmatprep.mubr.f32.mxu0 0.0
        %564 = vmatmul.mubr.f32.gmra.mxu0 %v467
        %v565 = vpop.f32.mrf.mxu0
        %v566 = vadd.f32 %v424, %v565
        %v567 = vpop.f32.mrf.mxu0
        %v568 = vadd.f32 %v424, %v567
        %569 = vmatprep.mubr.f32.mxu0 0.0
        %570 = vmatmul.mubr.f32.gmra.mxu0 %v470
        %v571 = vpop.f32.mrf.mxu0
        %v572 = vadd.f32 %v429, %v571
        %v573 = vpop.f32.mrf.mxu0
        %v574 = vadd.f32 %v429, %v573
        %575 = vmatprep.mubr.f32.mxu0 0.0
        %576 = vmatmul.mubr.f32.gmra.mxu0 %v473
        %v577 = vpop.f32.mrf.mxu0
        %v578 = vadd.f32 %v434, %v577
        %v579 = vpop.f32.mrf.mxu0
        %v580 = vadd.f32 %v434, %v579
        %581 = vmatprep.mubr.f32.mxu0 0.0
        %582 = vmatmul.mubr.f32.gmra.mxu0 %v476
        %v583 = vpop.f32.mrf.mxu0
        %v584 = vadd.f32 %v439, %v583
        %v585 = vpop.f32.mrf.mxu0
        %v586 = vadd.f32 %v439, %v585
        %587 = vmatprep.mubr.f32.mxu0 0.0
        %588 = vmatmul.mubr.f32.gmra.mxu0 %v479
        %v589 = vpop.f32.mrf.mxu0
        %v590 = vadd.f32 %v444, %v589
        %v591 = vpop.f32.mrf.mxu0
        %v592 = vadd.f32 %v444, %v591
        %593 = vmatprep.mubr.f32.mxu0 0.0
        %594 = vmatmul.mubr.f32.gmra.mxu0 %v482
        %v595 = vpop.f32.mrf.mxu0
        %v596 = vadd.f32 %v449, %v595
        %v597 = vpop.f32.mrf.mxu0
        %v598 = vadd.f32 %v449, %v597
        %599 = vmatprep.mubr.f32.mxu0 0.0
        %600 = vmatmul.mubr.f32.gmra.mxu0 %v485
        %v601 = vpop.f32.mrf.mxu0
        %v602 = vadd.f32 %v454, %v601
        %v603 = vpop.f32.mrf.mxu0
        %v604 = vadd.f32 %v454, %v603
        %605 = vmatprep.mubr.f32.mxu0 0.0
        %606 = vmatmul.mubr.f32.gmra.mxu0 %v488
        %v607 = vpop.f32.mrf.mxu0
        %v608 = vadd.f32 %v459, %v607
        %v609 = vpop.f32.mrf.mxu0
        %v610 = vadd.f32 %v459, %v609
        %611 = vdwg.mxu0
        %612 = vmatprep.subr.mxu0 0.0
        %613 = vmatpush1.msra.mxu0 0.0
        %614 = vmatprep.subr.mxu0 0.0
        %615 = vmatpush1.msra.mxu0 0.0
        %616 = vmatprep.subr.mxu0 0.0
        %617 = vmatpush1.msra.mxu0 0.0
        %618 = vmatprep.subr.mxu0 0.0
        %619 = vmatpush1.msra.mxu0 0.0
        %620 = vmatprep.subr.mxu0 0.0
        %621 = vmatpush1.msra.mxu0 0.0
        %622 = vmatprep.subr.mxu0 0.0
        %623 = vmatpush1.msra.mxu0 0.0
        %624 = vmatprep.subr.mxu0 0.0
        %625 = vmatpush1.msra.mxu0 0.0
        %626 = vmatprep.subr.mxu0 0.0
        %627 = vmatpush1.msra.mxu0 0.0
        %628 = vmatprep.subr.mxu0 0.0
        %629 = vmatpush1.msra.mxu0 0.0
        %630 = vmatprep.subr.mxu0 0.0
        %631 = vmatpush1.msra.mxu0 0.0
        %632 = vmatprep.subr.mxu0 0.0
        %633 = vmatpush1.msra.mxu0 0.0
        %634 = vmatprep.subr.mxu0 0.0
        %635 = vmatpush1.msra.mxu0 0.0
        %636 = vmatprep.subr.mxu0 0.0
        %637 = vmatpush1.msra.mxu0 0.0
        %638 = vmatprep.subr.mxu0 0.0
        %639 = vmatpush1.msra.mxu0 0.0
        %640 = vmatprep.subr.mxu0 0.0
        %641 = vmatpush1.msra.mxu0 0.0
        %642 = vmatprep.subr.mxu0 %v497
        %643 = vmatpush1.msra.mxu0 %v495
        %644 = vmatprep.subr.mxu0 0.0
        %645 = vmatpush2.msra.mxu0 0.0
        %646 = vmatprep.subr.mxu0 0.0
        %647 = vmatpush2.msra.mxu0 0.0
        %648 = vmatprep.subr.mxu0 0.0
        %649 = vmatpush2.msra.mxu0 0.0
        %650 = vmatprep.subr.mxu0 0.0
        %651 = vmatpush2.msra.mxu0 0.0
        %652 = vmatprep.subr.mxu0 0.0
        %653 = vmatpush2.msra.mxu0 0.0
        %654 = vmatprep.subr.mxu0 0.0
        %655 = vmatpush2.msra.mxu0 0.0
        %656 = vmatprep.subr.mxu0 0.0
        %657 = vmatpush2.msra.mxu0 0.0
        %658 = vmatprep.subr.mxu0 0.0
        %659 = vmatpush2.msra.mxu0 0.0
        %660 = vmatprep.subr.mxu0 0.0
        %661 = vmatpush2.msra.mxu0 0.0
        %662 = vmatprep.subr.mxu0 0.0
        %663 = vmatpush2.msra.mxu0 0.0
        %664 = vmatprep.subr.mxu0 0.0
        %665 = vmatpush2.msra.mxu0 0.0
        %666 = vmatprep.subr.mxu0 0.0
        %667 = vmatpush2.msra.mxu0 0.0
        %668 = vmatprep.subr.mxu0 0.0
        %669 = vmatpush2.msra.mxu0 0.0
        %670 = vmatprep.subr.mxu0 0.0
        %671 = vmatpush2.msra.mxu0 0.0
        %672 = vmatprep.subr.mxu0 0.0
        %673 = vmatpush2.msra.mxu0 0.0
        %674 = vmatprep.subr.mxu0 0.0
        %675 = vmatpush2.msra.mxu0 0.0
        %676 = vmatprep.mubr.f32.mxu0 0.0
        %677 = vmatmul.mubr.f32.gmra.mxu0 %v467
        %v678 = vpop.f32.mrf.mxu0
        %v679 = vadd.f32 %v424, %v678
        %v680 = vpop.f32.mrf.mxu0
        %v681 = vadd.f32 %v424, %v680
        %682 = vmatprep.mubr.f32.mxu0 0.0
        %683 = vmatmul.mubr.f32.gmra.mxu0 %v470
        %v684 = vpop.f32.mrf.mxu0
        %v685 = vadd.f32 %v429, %v684
        %v686 = vpop.f32.mrf.mxu0
        %v687 = vadd.f32 %v429, %v686
        %688 = vmatprep.mubr.f32.mxu0 0.0
        %689 = vmatmul.mubr.f32.gmra.mxu0 %v473
        %v690 = vpop.f32.mrf.mxu0
        %v691 = vadd.f32 %v434, %v690
        %v692 = vpop.f32.mrf.mxu0
        %v693 = vadd.f32 %v434, %v692
        %694 = vmatprep.mubr.f32.mxu0 0.0
        %695 = vmatmul.mubr.f32.gmra.mxu0 %v476
        %v696 = vpop.f32.mrf.mxu0
        %v697 = vadd.f32 %v439, %v696
        %v698 = vpop.f32.mrf.mxu0
        %v699 = vadd.f32 %v439, %v698
        %700 = vmatprep.mubr.f32.mxu0 0.0
        %701 = vmatmul.mubr.f32.gmra.mxu0 %v479
        %v702 = vpop.f32.mrf.mxu0
        %v703 = vadd.f32 %v444, %v702
        %v704 = vpop.f32.mrf.mxu0
        %v705 = vadd.f32 %v444, %v704
        %706 = vmatprep.mubr.f32.mxu0 0.0
        %707 = vmatmul.mubr.f32.gmra.mxu0 %v482
        %v708 = vpop.f32.mrf.mxu0
        %v709 = vadd.f32 %v449, %v708
        %v710 = vpop.f32.mrf.mxu0
        %v711 = vadd.f32 %v449, %v710
        %712 = vmatprep.mubr.f32.mxu0 0.0
        %713 = vmatmul.mubr.f32.gmra.mxu0 %v485
        %v714 = vpop.f32.mrf.mxu0
        %v715 = vadd.f32 %v454, %v714
        %v716 = vpop.f32.mrf.mxu0
        %v717 = vadd.f32 %v454, %v716
        %718 = vmatprep.mubr.f32.mxu0 0.0
        %719 = vmatmul.mubr.f32.gmra.mxu0 %v488
        %v720 = vpop.f32.mrf.mxu0
        %v721 = vadd.f32 %v459, %v720
        %v722 = vpop.f32.mrf.mxu0
        %v723 = vadd.f32 %v459, %v722
        %724 = vdwg.mxu0
        %v725 = vmax.f32 %v566, 0.0
        %v726 = vmax.f32 %v568, 0.0
        %v727 = vmax.f32 %v679, 0.0
        %v728 = vmax.f32 %v681, 0.0
        %v729 = vmax.f32 %v572, 0.0
        %v730 = vmax.f32 %v574, 0.0
        %v731 = vmax.f32 %v685, 0.0
        %v732 = vmax.f32 %v687, 0.0
        %v733 = vmax.f32 %v578, 0.0
        %v734 = vmax.f32 %v580, 0.0
        %v735 = vmax.f32 %v691, 0.0
        %v736 = vmax.f32 %v693, 0.0
        %v737 = vmax.f32 %v584, 0.0
        %v738 = vmax.f32 %v586, 0.0
        %v739 = vmax.f32 %v697, 0.0
        %v740 = vmax.f32 %v699, 0.0
        %v741 = vmax.f32 %v590, 0.0
        %v742 = vmax.f32 %v592, 0.0
        %v743 = vmax.f32 %v703, 0.0
        %v744 = vmax.f32 %v705, 0.0
        %v745 = vmax.f32 %v596, 0.0
        %v746 = vmax.f32 %v598, 0.0
        %v747 = vmax.f32 %v709, 0.0
        %v748 = vmax.f32 %v711, 0.0
        %v749 = vmax.f32 %v602, 0.0
        %v750 = vmax.f32 %v604, 0.0
        %v751 = vmax.f32 %v715, 0.0
        %v752 = vmax.f32 %v717, 0.0
        %v753 = vmax.f32 %v608, 0.0
        %v754 = vmax.f32 %v610, 0.0
        %v755 = vmax.f32 %v721, 0.0
        %v756 = vmax.f32 %v723, 0.0
        %v757 = vld [vmem:[%s3] sm:$0xff]
        %v758 = vld [vmem:[%s3 + $0x8] sm:$0xff]
        %v759 = vld [vmem:[%s3 + $0x10] sm:$0xff]
        %v760 = vld [vmem:[%s3 + $0x18] sm:$0xff]
        %v761 = vld [vmem:[%s3 + $0x20] sm:$0xff]
        %v762 = vld [vmem:[%s3 + $0x28] sm:$0xff]
        %v763 = vld [vmem:[%s3 + $0x30] sm:$0xff]
        %v764 = vld [vmem:[%s3 + $0x38] sm:$0xff]
        %v765 = vld [vmem:[%s4] sm:$0xff]
        %v766 = vld [vmem:[%s4 + $0x8] sm:$0xff]
        %v767 = vld [vmem:[%s4 + $0x10] sm:$0xff]
        %v768 = vld [vmem:[%s4 + $0x18] sm:$0xff]
        %v769 = vld [vmem:[%s4 + $0x20] sm:$0xff]
        %v770 = vld [vmem:[%s4 + $0x28] sm:$0xff]
        %v771 = vld [vmem:[%s4 + $0x30] sm:$0xff]
        %v772 = vld [vmem:[%s4 + $0x38] sm:$0xff]
        %774 = vset.pattern.permute.xlu0 0
        %775 = vperm.xlu0 %774, %v765
        %v776 = vpop.permute.xlu0 %775
        %779 = vset.pattern.permute.xlu0 0
        %780 = vperm.xlu0 %779, %v766
        %v781 = vpop.permute.xlu0 %780
        %784 = vset.pattern.permute.xlu0 0
        %785 = vperm.xlu0 %784, %v767
        %v786 = vpop.permute.xlu0 %785
        %789 = vset.pattern.permute.xlu0 0
        %790 = vperm.xlu0 %789, %v768
        %v791 = vpop.permute.xlu0 %790
        %794 = vset.pattern.permute.xlu0 0
        %795 = vperm.xlu0 %794, %v769
        %v796 = vpop.permute.xlu0 %795
        %799 = vset.pattern.permute.xlu0 0
        %800 = vperm.xlu0 %799, %v770
        %v801 = vpop.permute.xlu0 %800
        %804 = vset.pattern.permute.xlu0 0
        %805 = vperm.xlu0 %804, %v771
        %v806 = vpop.permute.xlu0 %805
        %809 = vset.pattern.permute.xlu0 0
        %810 = vperm.xlu0 %809, %v772
        %v811 = vpop.permute.xlu0 %810
        %vm813 = vcmask 523264
        %v815 = vsel %vm813, %v757, 0
        %v818 = vsel %vm813, %v758, 0
        %v821 = vsel %vm813, %v759, 0
        %v824 = vsel %vm813, %v760, 0
        %v827 = vsel %vm813, %v761, 0
        %v830 = vsel %vm813, %v762, 0
        %v833 = vsel %vm813, %v763, 0
        %v836 = vsel %vm813, %v764, 0
        %838 = vmatprep.subr.mxu0 0.0
        %839 = vmatpush1.msra.mxu0 0.0
        %840 = vmatprep.subr.mxu0 0.0
        %841 = vmatpush1.msra.mxu0 0.0
        %842 = vmatprep.subr.mxu0 0.0
        %843 = vmatpush1.msra.mxu0 0.0
        %844 = vmatprep.subr.mxu0 0.0
        %845 = vmatpush1.msra.mxu0 0.0
        %846 = vmatprep.subr.mxu0 0.0
        %847 = vmatpush1.msra.mxu0 0.0
        %848 = vmatprep.subr.mxu0 0.0
        %849 = vmatpush1.msra.mxu0 0.0
        %850 = vmatprep.subr.mxu0 0.0
        %851 = vmatpush1.msra.mxu0 0.0
        %852 = vmatprep.subr.mxu0 0.0
        %853 = vmatpush1.msra.mxu0 0.0
        %854 = vmatprep.subr.mxu0 %v754
        %855 = vmatpush1.msra.mxu0 %v753
        %856 = vmatprep.subr.mxu0 %v750
        %857 = vmatpush1.msra.mxu0 %v749
        %858 = vmatprep.subr.mxu0 %v746
        %859 = vmatpush1.msra.mxu0 %v745
        %860 = vmatprep.subr.mxu0 %v742
        %861 = vmatpush1.msra.mxu0 %v741
        %862 = vmatprep.subr.mxu0 %v738
        %863 = vmatpush1.msra.mxu0 %v737
        %864 = vmatprep.subr.mxu0 %v734
        %865 = vmatpush1.msra.mxu0 %v733
        %866 = vmatprep.subr.mxu0 %v730
        %867 = vmatpush1.msra.mxu0 %v729
        %868 = vmatprep.subr.mxu0 %v726
        %869 = vmatpush1.msra.mxu0 %v725
        %870 = vmatprep.subr.mxu0 0.0
        %871 = vmatpush2.msra.mxu0 0.0
        %872 = vmatprep.subr.mxu0 0.0
        %873 = vmatpush2.msra.mxu0 0.0
        %874 = vmatprep.subr.mxu0 0.0
        %875 = vmatpush2.msra.mxu0 0.0
        %876 = vmatprep.subr.mxu0 0.0
        %877 = vmatpush2.msra.mxu0 0.0
        %878 = vmatprep.subr.mxu0 0.0
        %879 = vmatpush2.msra.mxu0 0.0
        %880 = vmatprep.subr.mxu0 0.0
        %881 = vmatpush2.msra.mxu0 0.0
        %882 = vmatprep.subr.mxu0 0.0
        %883 = vmatpush2.msra.mxu0 0.0
        %884 = vmatprep.subr.mxu0 0.0
        %885 = vmatpush2.msra.mxu0 0.0
        %886 = vmatprep.subr.mxu0 0.0
        %887 = vmatpush2.msra.mxu0 0.0
        %888 = vmatprep.subr.mxu0 0.0
        %889 = vmatpush2.msra.mxu0 0.0
        %890 = vmatprep.subr.mxu0 0.0
        %891 = vmatpush2.msra.mxu0 0.0
        %892 = vmatprep.subr.mxu0 0.0
        %893 = vmatpush2.msra.mxu0 0.0
        %894 = vmatprep.subr.mxu0 0.0
        %895 = vmatpush2.msra.mxu0 0.0
        %896 = vmatprep.subr.mxu0 0.0
        %897 = vmatpush2.msra.mxu0 0.0
        %898 = vmatprep.subr.mxu0 0.0
        %899 = vmatpush2.msra.mxu0 0.0
        %900 = vmatprep.subr.mxu0 0.0
        %901 = vmatpush2.msra.mxu0 0.0
        %902 = vmatprep.mubr.f32.mxu0 0.0
        %903 = vmatmul.mubr.f32.gmra.mxu0 %v815
        %v904 = vpop.f32.mrf.mxu0
        %v905 = vadd.f32 %v776, %v904
        %v906 = vpop.f32.mrf.mxu0
        %v907 = vadd.f32 %v776, %v906
        %908 = vmatprep.mubr.f32.mxu0 0.0
        %909 = vmatmul.mubr.f32.gmra.mxu0 %v818
        %v910 = vpop.f32.mrf.mxu0
        %v911 = vadd.f32 %v781, %v910
        %v912 = vpop.f32.mrf.mxu0
        %v913 = vadd.f32 %v781, %v912
        %914 = vmatprep.mubr.f32.mxu0 0.0
        %915 = vmatmul.mubr.f32.gmra.mxu0 %v821
        %v916 = vpop.f32.mrf.mxu0
        %v917 = vadd.f32 %v786, %v916
        %v918 = vpop.f32.mrf.mxu0
        %v919 = vadd.f32 %v786, %v918
        %920 = vmatprep.mubr.f32.mxu0 0.0
        %921 = vmatmul.mubr.f32.gmra.mxu0 %v824
        %v922 = vpop.f32.mrf.mxu0
        %v923 = vadd.f32 %v791, %v922
        %v924 = vpop.f32.mrf.mxu0
        %v925 = vadd.f32 %v791, %v924
        %926 = vmatprep.mubr.f32.mxu0 0.0
        %927 = vmatmul.mubr.f32.gmra.mxu0 %v827
        %v928 = vpop.f32.mrf.mxu0
        %v929 = vadd.f32 %v796, %v928
        %v930 = vpop.f32.mrf.mxu0
        %v931 = vadd.f32 %v796, %v930
        %932 = vmatprep.mubr.f32.mxu0 0.0
        %933 = vmatmul.mubr.f32.gmra.mxu0 %v830
        %v934 = vpop.f32.mrf.mxu0
        %v935 = vadd.f32 %v801, %v934
        %v936 = vpop.f32.mrf.mxu0
        %v937 = vadd.f32 %v801, %v936
        %938 = vmatprep.mubr.f32.mxu0 0.0
        %939 = vmatmul.mubr.f32.gmra.mxu0 %v833
        %v940 = vpop.f32.mrf.mxu0
        %v941 = vadd.f32 %v806, %v940
        %v942 = vpop.f32.mrf.mxu0
        %v943 = vadd.f32 %v806, %v942
        %944 = vmatprep.mubr.f32.mxu0 0.0
        %945 = vmatmul.mubr.f32.gmra.mxu0 %v836
        %v946 = vpop.f32.mrf.mxu0
        %v947 = vadd.f32 %v811, %v946
        %v948 = vpop.f32.mrf.mxu0
        %v949 = vadd.f32 %v811, %v948
        %950 = vdwg.mxu0
        %951 = vmatprep.subr.mxu0 0.0
        %952 = vmatpush1.msra.mxu0 0.0
        %953 = vmatprep.subr.mxu0 0.0
        %954 = vmatpush1.msra.mxu0 0.0
        %955 = vmatprep.subr.mxu0 0.0
        %956 = vmatpush1.msra.mxu0 0.0
        %957 = vmatprep.subr.mxu0 0.0
        %958 = vmatpush1.msra.mxu0 0.0
        %959 = vmatprep.subr.mxu0 0.0
        %960 = vmatpush1.msra.mxu0 0.0
        %961 = vmatprep.subr.mxu0 0.0
        %962 = vmatpush1.msra.mxu0 0.0
        %963 = vmatprep.subr.mxu0 0.0
        %964 = vmatpush1.msra.mxu0 0.0
        %965 = vmatprep.subr.mxu0 0.0
        %966 = vmatpush1.msra.mxu0 0.0
        %967 = vmatprep.subr.mxu0 %v756
        %968 = vmatpush1.msra.mxu0 %v755
        %969 = vmatprep.subr.mxu0 %v752
        %970 = vmatpush1.msra.mxu0 %v751
        %971 = vmatprep.subr.mxu0 %v748
        %972 = vmatpush1.msra.mxu0 %v747
        %973 = vmatprep.subr.mxu0 %v744
        %974 = vmatpush1.msra.mxu0 %v743
        %975 = vmatprep.subr.mxu0 %v740
        %976 = vmatpush1.msra.mxu0 %v739
        %977 = vmatprep.subr.mxu0 %v736
        %978 = vmatpush1.msra.mxu0 %v735
        %979 = vmatprep.subr.mxu0 %v732
        %980 = vmatpush1.msra.mxu0 %v731
        %981 = vmatprep.subr.mxu0 %v728
        %982 = vmatpush1.msra.mxu0 %v727
        %983 = vmatprep.subr.mxu0 0.0
        %984 = vmatpush2.msra.mxu0 0.0
        %985 = vmatprep.subr.mxu0 0.0
        %986 = vmatpush2.msra.mxu0 0.0
        %987 = vmatprep.subr.mxu0 0.0
        %988 = vmatpush2.msra.mxu0 0.0
        %989 = vmatprep.subr.mxu0 0.0
        %990 = vmatpush2.msra.mxu0 0.0
        %991 = vmatprep.subr.mxu0 0.0
        %992 = vmatpush2.msra.mxu0 0.0
        %993 = vmatprep.subr.mxu0 0.0
        %994 = vmatpush2.msra.mxu0 0.0
        %995 = vmatprep.subr.mxu0 0.0
        %996 = vmatpush2.msra.mxu0 0.0
        %997 = vmatprep.subr.mxu0 0.0
        %998 = vmatpush2.msra.mxu0 0.0
        %999 = vmatprep.subr.mxu0 0.0
        %1000 = vmatpush2.msra.mxu0 0.0
        %1001 = vmatprep.subr.mxu0 0.0
        %1002 = vmatpush2.msra.mxu0 0.0
        %1003 = vmatprep.subr.mxu0 0.0
        %1004 = vmatpush2.msra.mxu0 0.0
        %1005 = vmatprep.subr.mxu0 0.0
        %1006 = vmatpush2.msra.mxu0 0.0
        %1007 = vmatprep.subr.mxu0 0.0
        %1008 = vmatpush2.msra.mxu0 0.0
        %1009 = vmatprep.subr.mxu0 0.0
        %1010 = vmatpush2.msra.mxu0 0.0
        %1011 = vmatprep.subr.mxu0 0.0
        %1012 = vmatpush2.msra.mxu0 0.0
        %1013 = vmatprep.subr.mxu0 0.0
        %1014 = vmatpush2.msra.mxu0 0.0
        %1015 = vmatprep.mubr.f32.mxu0 0.0
        %1016 = vmatmul.mubr.f32.gmra.mxu0 %v815
        %v1017 = vpop.f32.mrf.mxu0
        %v1018 = vadd.f32 %v776, %v1017
        %v1019 = vpop.f32.mrf.mxu0
        %v1020 = vadd.f32 %v776, %v1019
        %1021 = vmatprep.mubr.f32.mxu0 0.0
        %1022 = vmatmul.mubr.f32.gmra.mxu0 %v818
        %v1023 = vpop.f32.mrf.mxu0
        %v1024 = vadd.f32 %v781, %v1023
        %v1025 = vpop.f32.mrf.mxu0
        %v1026 = vadd.f32 %v781, %v1025
        %1027 = vmatprep.mubr.f32.mxu0 0.0
        %1028 = vmatmul.mubr.f32.gmra.mxu0 %v821
        %v1029 = vpop.f32.mrf.mxu0
        %v1030 = vadd.f32 %v786, %v1029
        %v1031 = vpop.f32.mrf.mxu0
        %v1032 = vadd.f32 %v786, %v1031
        %1033 = vmatprep.mubr.f32.mxu0 0.0
        %1034 = vmatmul.mubr.f32.gmra.mxu0 %v824
        %v1035 = vpop.f32.mrf.mxu0
        %v1036 = vadd.f32 %v791, %v1035
        %v1037 = vpop.f32.mrf.mxu0
        %v1038 = vadd.f32 %v791, %v1037
        %1039 = vmatprep.mubr.f32.mxu0 0.0
        %1040 = vmatmul.mubr.f32.gmra.mxu0 %v827
        %v1041 = vpop.f32.mrf.mxu0
        %v1042 = vadd.f32 %v796, %v1041
        %v1043 = vpop.f32.mrf.mxu0
        %v1044 = vadd.f32 %v796, %v1043
        %1045 = vmatprep.mubr.f32.mxu0 0.0
        %1046 = vmatmul.mubr.f32.gmra.mxu0 %v830
        %v1047 = vpop.f32.mrf.mxu0
        %v1048 = vadd.f32 %v801, %v1047
        %v1049 = vpop.f32.mrf.mxu0
        %v1050 = vadd.f32 %v801, %v1049
        %1051 = vmatprep.mubr.f32.mxu0 0.0
        %1052 = vmatmul.mubr.f32.gmra.mxu0 %v833
        %v1053 = vpop.f32.mrf.mxu0
        %v1054 = vadd.f32 %v806, %v1053
        %v1055 = vpop.f32.mrf.mxu0
        %v1056 = vadd.f32 %v806, %v1055
        %1057 = vmatprep.mubr.f32.mxu0 0.0
        %1058 = vmatmul.mubr.f32.gmra.mxu0 %v836
        %v1059 = vpop.f32.mrf.mxu0
        %v1060 = vadd.f32 %v811, %v1059
        %v1061 = vpop.f32.mrf.mxu0
        %v1062 = vadd.f32 %v811, %v1061
        %1063 = vdwg.mxu0
        %v1064 = vmax.f32 %v905, 0.0
        %v1065 = vmax.f32 %v907, 0.0
        %v1066 = vmax.f32 %v1018, 0.0
        %v1067 = vmax.f32 %v1020, 0.0
        %v1068 = vmax.f32 %v911, 0.0
        %v1069 = vmax.f32 %v913, 0.0
        %v1070 = vmax.f32 %v1024, 0.0
        %v1071 = vmax.f32 %v1026, 0.0
        %v1072 = vmax.f32 %v917, 0.0
        %v1073 = vmax.f32 %v919, 0.0
        %v1074 = vmax.f32 %v1030, 0.0
        %v1075 = vmax.f32 %v1032, 0.0
        %v1076 = vmax.f32 %v923, 0.0
        %v1077 = vmax.f32 %v925, 0.0
        %v1078 = vmax.f32 %v1036, 0.0
        %v1079 = vmax.f32 %v1038, 0.0
        %v1080 = vmax.f32 %v929, 0.0
        %v1081 = vmax.f32 %v931, 0.0
        %v1082 = vmax.f32 %v1042, 0.0
        %v1083 = vmax.f32 %v1044, 0.0
        %v1084 = vmax.f32 %v935, 0.0
        %v1085 = vmax.f32 %v937, 0.0
        %v1086 = vmax.f32 %v1048, 0.0
        %v1087 = vmax.f32 %v1050, 0.0
        %v1088 = vmax.f32 %v941, 0.0
        %v1089 = vmax.f32 %v943, 0.0
        %v1090 = vmax.f32 %v1054, 0.0
        %v1091 = vmax.f32 %v1056, 0.0
        %v1092 = vmax.f32 %v947, 0.0
        %v1093 = vmax.f32 %v949, 0.0
        %v1094 = vmax.f32 %v1060, 0.0
        %v1095 = vmax.f32 %v1062, 0.0
        %v1096 = vld [vmem:[%s5] sm:$0xf]
        %v1097 = vld [vmem:[%s6] sm:$0xf]
        %1099 = vset.pattern.permute.xlu0 0
        %1100 = vperm.xlu0 %1099, %v1097
        %v1101 = vpop.permute.xlu0 %1100
        %v1104 = vsel %vm813, %v1096, 0
        %1106 = vmatprep.subr.mxu0 0.0
        %1107 = vmatpush1.msra.mxu0 0.0
        %1108 = vmatprep.subr.mxu0 0.0
        %1109 = vmatpush1.msra.mxu0 0.0
        %1110 = vmatprep.subr.mxu0 0.0
        %1111 = vmatpush1.msra.mxu0 0.0
        %1112 = vmatprep.subr.mxu0 0.0
        %1113 = vmatpush1.msra.mxu0 0.0
        %1114 = vmatprep.subr.mxu0 0.0
        %1115 = vmatpush1.msra.mxu0 0.0
        %1116 = vmatprep.subr.mxu0 0.0
        %1117 = vmatpush1.msra.mxu0 0.0
        %1118 = vmatprep.subr.mxu0 0.0
        %1119 = vmatpush1.msra.mxu0 0.0
        %1120 = vmatprep.subr.mxu0 0.0
        %1121 = vmatpush1.msra.mxu0 0.0
        %1122 = vmatprep.subr.mxu0 %v1093
        %1123 = vmatpush1.msra.mxu0 %v1092
        %1124 = vmatprep.subr.mxu0 %v1089
        %1125 = vmatpush1.msra.mxu0 %v1088
        %1126 = vmatprep.subr.mxu0 %v1085
        %1127 = vmatpush1.msra.mxu0 %v1084
        %1128 = vmatprep.subr.mxu0 %v1081
        %1129 = vmatpush1.msra.mxu0 %v1080
        %1130 = vmatprep.subr.mxu0 %v1077
        %1131 = vmatpush1.msra.mxu0 %v1076
        %1132 = vmatprep.subr.mxu0 %v1073
        %1133 = vmatpush1.msra.mxu0 %v1072
        %1134 = vmatprep.subr.mxu0 %v1069
        %1135 = vmatpush1.msra.mxu0 %v1068
        %1136 = vmatprep.subr.mxu0 %v1065
        %1137 = vmatpush1.msra.mxu0 %v1064
        %1138 = vmatprep.subr.mxu0 0.0
        %1139 = vmatpush2.msra.mxu0 0.0
        %1140 = vmatprep.subr.mxu0 0.0
        %1141 = vmatpush2.msra.mxu0 0.0
        %1142 = vmatprep.subr.mxu0 0.0
        %1143 = vmatpush2.msra.mxu0 0.0
        %1144 = vmatprep.subr.mxu0 0.0
        %1145 = vmatpush2.msra.mxu0 0.0
        %1146 = vmatprep.subr.mxu0 0.0
        %1147 = vmatpush2.msra.mxu0 0.0
        %1148 = vmatprep.subr.mxu0 0.0
        %1149 = vmatpush2.msra.mxu0 0.0
        %1150 = vmatprep.subr.mxu0 0.0
        %1151 = vmatpush2.msra.mxu0 0.0
        %1152 = vmatprep.subr.mxu0 0.0
        %1153 = vmatpush2.msra.mxu0 0.0
        %1154 = vmatprep.subr.mxu0 0.0
        %1155 = vmatpush2.msra.mxu0 0.0
        %1156 = vmatprep.subr.mxu0 0.0
        %1157 = vmatpush2.msra.mxu0 0.0
        %1158 = vmatprep.subr.mxu0 0.0
        %1159 = vmatpush2.msra.mxu0 0.0
        %1160 = vmatprep.subr.mxu0 0.0
        %1161 = vmatpush2.msra.mxu0 0.0
        %1162 = vmatprep.subr.mxu0 0.0
        %1163 = vmatpush2.msra.mxu0 0.0
        %1164 = vmatprep.subr.mxu0 0.0
        %1165 = vmatpush2.msra.mxu0 0.0
        %1166 = vmatprep.subr.mxu0 0.0
        %1167 = vmatpush2.msra.mxu0 0.0
        %1168 = vmatprep.subr.mxu0 0.0
        %1169 = vmatpush2.msra.mxu0 0.0
        %1170 = vmatprep.mubr.f32.mxu0 0.0
        %1171 = vmatmul.mubr.f32.gmra.mxu0 %v1104
        %v1172 = vpop.f32.mrf.mxu0
        %v1173 = vadd.f32 %v1101, %v1172
        %v1174 = vpop.f32.mrf.mxu0
        %v1175 = vadd.f32 %v1101, %v1174
        %1176 = vdwg.mxu0
        %1177 = vmatprep.subr.mxu0 0.0
        %1178 = vmatpush1.msra.mxu0 0.0
        %1179 = vmatprep.subr.mxu0 0.0
        %1180 = vmatpush1.msra.mxu0 0.0
        %1181 = vmatprep.subr.mxu0 0.0
        %1182 = vmatpush1.msra.mxu0 0.0
        %1183 = vmatprep.subr.mxu0 0.0
        %1184 = vmatpush1.msra.mxu0 0.0
        %1185 = vmatprep.subr.mxu0 0.0
        %1186 = vmatpush1.msra.mxu0 0.0
        %1187 = vmatprep.subr.mxu0 0.0
        %1188 = vmatpush1.msra.mxu0 0.0
        %1189 = vmatprep.subr.mxu0 0.0
        %1190 = vmatpush1.msra.mxu0 0.0
        %1191 = vmatprep.subr.mxu0 0.0
        %1192 = vmatpush1.msra.mxu0 0.0
        %1193 = vmatprep.subr.mxu0 %v1095
        %1194 = vmatpush1.msra.mxu0 %v1094
        %1195 = vmatprep.subr.mxu0 %v1091
        %1196 = vmatpush1.msra.mxu0 %v1090
        %1197 = vmatprep.subr.mxu0 %v1087
        %1198 = vmatpush1.msra.mxu0 %v1086
        %1199 = vmatprep.subr.mxu0 %v1083
        %1200 = vmatpush1.msra.mxu0 %v1082
        %1201 = vmatprep.subr.mxu0 %v1079
        %1202 = vmatpush1.msra.mxu0 %v1078
        %1203 = vmatprep.subr.mxu0 %v1075
        %1204 = vmatpush1.msra.mxu0 %v1074
        %1205 = vmatprep.subr.mxu0 %v1071
        %1206 = vmatpush1.msra.mxu0 %v1070
        %1207 = vmatprep.subr.mxu0 %v1067
        %1208 = vmatpush1.msra.mxu0 %v1066
        %1209 = vmatprep.subr.mxu0 0.0
        %1210 = vmatpush2.msra.mxu0 0.0
        %1211 = vmatprep.subr.mxu0 0.0
        %1212 = vmatpush2.msra.mxu0 0.0
        %1213 = vmatprep.subr.mxu0 0.0
        %1214 = vmatpush2.msra.mxu0 0.0
        %1215 = vmatprep.subr.mxu0 0.0
        %1216 = vmatpush2.msra.mxu0 0.0
        %1217 = vmatprep.subr.mxu0 0.0
        %1218 = vmatpush2.msra.mxu0 0.0
        %1219 = vmatprep.subr.mxu0 0.0
        %1220 = vmatpush2.msra.mxu0 0.0
        %1221 = vmatprep.subr.mxu0 0.0
        %1222 = vmatpush2.msra.mxu0 0.0
        %1223 = vmatprep.subr.mxu0 0.0
        %1224 = vmatpush2.msra.mxu0 0.0
        %1225 = vmatprep.subr.mxu0 0.0
        %1226 = vmatpush2.msra.mxu0 0.0
        %1227 = vmatprep.subr.mxu0 0.0
        %1228 = vmatpush2.msra.mxu0 0.0
        %1229 = vmatprep.subr.mxu0 0.0
        %1230 = vmatpush2.msra.mxu0 0.0
        %1231 = vmatprep.subr.mxu0 0.0
        %1232 = vmatpush2.msra.mxu0 0.0
        %1233 = vmatprep.subr.mxu0 0.0
        %1234 = vmatpush2.msra.mxu0 0.0
        %1235 = vmatprep.subr.mxu0 0.0
        %1236 = vmatpush2.msra.mxu0 0.0
        %1237 = vmatprep.subr.mxu0 0.0
        %1238 = vmatpush2.msra.mxu0 0.0
        %1239 = vmatprep.subr.mxu0 0.0
        %1240 = vmatpush2.msra.mxu0 0.0
        %1241 = vmatprep.mubr.f32.mxu0 0.0
        %1242 = vmatmul.mubr.f32.gmra.mxu0 %v1104
        %v1243 = vpop.f32.mrf.mxu0
        %v1244 = vadd.f32 %v1101, %v1243
        %v1245 = vpop.f32.mrf.mxu0
        %v1246 = vadd.f32 %v1101, %v1245
        %1247 = vdwg.mxu0
        %v1248 = vsub.f32 0.0, %v1173
        %v1249 = vsub.f32 0.0, %v1175
        %v1250 = vsub.f32 0.0, %v1244
        %v1251 = vsub.f32 0.0, %v1246
        %v1252 = vmul.f32 %v1248, 1.442695
        %v1253 = vpow.pop %v1252
        %v1254 = vmul.f32 %v1249, 1.442695
        %v1255 = vpow.pop %v1254
        %v1256 = vmul.f32 %v1250, 1.442695
        %v1257 = vpow.pop %v1256
        %v1258 = vmul.f32 %v1251, 1.442695
        %v1259 = vpow.pop %v1258
        %v1260 = vadd.f32 %v1253, 1.0
        %v1261 = vadd.f32 %v1255, 1.0
        %v1262 = vadd.f32 %v1257, 1.0
        %v1263 = vadd.f32 %v1259, 1.0
        %v1264 = vrcp.pop %v1260
        %v1265 = vmul.f32 1.0, %v1264
        %v1266 = vrcp.pop %v1261
        %v1267 = vmul.f32 1.0, %v1266
        %v1268 = vrcp.pop %v1262
        %v1269 = vmul.f32 1.0, %v1268
        %v1270 = vrcp.pop %v1263
        %v1271 = vmul.f32 1.0, %v1270
        %v1276 = vcombine.low %v1265, %v1267
        %v1277 = vcombine.low %v1269, %v1271
        %1280 = vst [vmem:[%s383] sm:$0xff] %v1276
        %1281 = vst [vmem:[%s383 + $0x8] sm:$0xff] %v1277
        %v1282 = vld [vmem:[%s7] sm:$0x3]
        %v1283 = vld [vmem:[%s8] sm:$0x3]
        %1285 = vset.pattern.permute.xlu0 0
        %1286 = vperm.xlu0 %1285, %v1283
        %v1287 = vpop.permute.xlu0 %1286
        %v1290 = vsel %vm813, %v1282, 0
        %1292 = vmatprep.subr.mxu0 0.0
        %1293 = vmatpush1.msra.mxu0 0.0
        %1294 = vmatprep.subr.mxu0 0.0
        %1295 = vmatpush1.msra.mxu0 0.0
        %1296 = vmatprep.subr.mxu0 0.0
        %1297 = vmatpush1.msra.mxu0 0.0
        %1298 = vmatprep.subr.mxu0 0.0
        %1299 = vmatpush1.msra.mxu0 0.0
        %1300 = vmatprep.subr.mxu0 0.0
        %1301 = vmatpush1.msra.mxu0 0.0
        %1302 = vmatprep.subr.mxu0 0.0
        %1303 = vmatpush1.msra.mxu0 0.0
        %1304 = vmatprep.subr.mxu0 0.0
        %1305 = vmatpush1.msra.mxu0 0.0
        %1306 = vmatprep.subr.mxu0 0.0
        %1307 = vmatpush1.msra.mxu0 0.0
        %1308 = vmatprep.subr.mxu0 %v1093
        %1309 = vmatpush1.msra.mxu0 %v1092
        %1310 = vmatprep.subr.mxu0 %v1089
        %1311 = vmatpush1.msra.mxu0 %v1088
        %1312 = vmatprep.subr.mxu0 %v1085
        %1313 = vmatpush1.msra.mxu0 %v1084
        %1314 = vmatprep.subr.mxu0 %v1081
        %1315 = vmatpush1.msra.mxu0 %v1080
        %1316 = vmatprep.subr.mxu0 %v1077
        %1317 = vmatpush1.msra.mxu0 %v1076
        %1318 = vmatprep.subr.mxu0 %v1073
        %1319 = vmatpush1.msra.mxu0 %v1072
        %1320 = vmatprep.subr.mxu0 %v1069
        %1321 = vmatpush1.msra.mxu0 %v1068
        %1322 = vmatprep.subr.mxu0 %v1065
        %1323 = vmatpush1.msra.mxu0 %v1064
        %1324 = vmatprep.subr.mxu0 0.0
        %1325 = vmatpush2.msra.mxu0 0.0
        %1326 = vmatprep.subr.mxu0 0.0
        %1327 = vmatpush2.msra.mxu0 0.0
        %1328 = vmatprep.subr.mxu0 0.0
        %1329 = vmatpush2.msra.mxu0 0.0
        %1330 = vmatprep.subr.mxu0 0.0
        %1331 = vmatpush2.msra.mxu0 0.0
        %1332 = vmatprep.subr.mxu0 0.0
        %1333 = vmatpush2.msra.mxu0 0.0
        %1334 = vmatprep.subr.mxu0 0.0
        %1335 = vmatpush2.msra.mxu0 0.0
        %1336 = vmatprep.subr.mxu0 0.0
        %1337 = vmatpush2.msra.mxu0 0.0
        %1338 = vmatprep.subr.mxu0 0.0
        %1339 = vmatpush2.msra.mxu0 0.0
        %1340 = vmatprep.subr.mxu0 0.0
        %1341 = vmatpush2.msra.mxu0 0.0
        %1342 = vmatprep.subr.mxu0 0.0
        %1343 = vmatpush2.msra.mxu0 0.0
        %1344 = vmatprep.subr.mxu0 0.0
        %1345 = vmatpush2.msra.mxu0 0.0
        %1346 = vmatprep.subr.mxu0 0.0
        %1347 = vmatpush2.msra.mxu0 0.0
        %1348 = vmatprep.subr.mxu0 0.0
        %1349 = vmatpush2.msra.mxu0 0.0
        %1350 = vmatprep.subr.mxu0 0.0
        %1351 = vmatpush2.msra.mxu0 0.0
        %1352 = vmatprep.subr.mxu0 0.0
        %1353 = vmatpush2.msra.mxu0 0.0
        %1354 = vmatprep.subr.mxu0 0.0
        %1355 = vmatpush2.msra.mxu0 0.0
        %1356 = vmatprep.mubr.f32.mxu0 0.0
        %1357 = vmatmul.mubr.f32.gmra.mxu0 %v1290
        %v1358 = vpop.f32.mrf.mxu0
        %v1359 = vadd.f32 %v1287, %v1358
        %v1360 = vpop.f32.mrf.mxu0
        %v1361 = vadd.f32 %v1287, %v1360
        %1362 = vdwg.mxu0
        %1363 = vmatprep.subr.mxu0 0.0
        %1364 = vmatpush1.msra.mxu0 0.0
        %1365 = vmatprep.subr.mxu0 0.0
        %1366 = vmatpush1.msra.mxu0 0.0
        %1367 = vmatprep.subr.mxu0 0.0
        %1368 = vmatpush1.msra.mxu0 0.0
        %1369 = vmatprep.subr.mxu0 0.0
        %1370 = vmatpush1.msra.mxu0 0.0
        %1371 = vmatprep.subr.mxu0 0.0
        %1372 = vmatpush1.msra.mxu0 0.0
        %1373 = vmatprep.subr.mxu0 0.0
        %1374 = vmatpush1.msra.mxu0 0.0
        %1375 = vmatprep.subr.mxu0 0.0
        %1376 = vmatpush1.msra.mxu0 0.0
        %1377 = vmatprep.subr.mxu0 0.0
        %1378 = vmatpush1.msra.mxu0 0.0
        %1379 = vmatprep.subr.mxu0 %v1095
        %1380 = vmatpush1.msra.mxu0 %v1094
        %1381 = vmatprep.subr.mxu0 %v1091
        %1382 = vmatpush1.msra.mxu0 %v1090
        %1383 = vmatprep.subr.mxu0 %v1087
        %1384 = vmatpush1.msra.mxu0 %v1086
        %1385 = vmatprep.subr.mxu0 %v1083
        %1386 = vmatpush1.msra.mxu0 %v1082
        %1387 = vmatprep.subr.mxu0 %v1079
        %1388 = vmatpush1.msra.mxu0 %v1078
        %1389 = vmatprep.subr.mxu0 %v1075
        %1390 = vmatpush1.msra.mxu0 %v1074
        %1391 = vmatprep.subr.mxu0 %v1071
        %1392 = vmatpush1.msra.mxu0 %v1070
        %1393 = vmatprep.subr.mxu0 %v1067
        %1394 = vmatpush1.msra.mxu0 %v1066
        %1395 = vmatprep.subr.mxu0 0.0
        %1396 = vmatpush2.msra.mxu0 0.0
        %1397 = vmatprep.subr.mxu0 0.0
        %1398 = vmatpush2.msra.mxu0 0.0
        %1399 = vmatprep.subr.mxu0 0.0
        %1400 = vmatpush2.msra.mxu0 0.0
        %1401 = vmatprep.subr.mxu0 0.0
        %1402 = vmatpush2.msra.mxu0 0.0
        %1403 = vmatprep.subr.mxu0 0.0
        %1404 = vmatpush2.msra.mxu0 0.0
        %1405 = vmatprep.subr.mxu0 0.0
        %1406 = vmatpush2.msra.mxu0 0.0
        %1407 = vmatprep.subr.mxu0 0.0
        %1408 = vmatpush2.msra.mxu0 0.0
        %1409 = vmatprep.subr.mxu0 0.0
        %1410 = vmatpush2.msra.mxu0 0.0
        %1411 = vmatprep.subr.mxu0 0.0
        %1412 = vmatpush2.msra.mxu0 0.0
        %1413 = vmatprep.subr.mxu0 0.0
        %1414 = vmatpush2.msra.mxu0 0.0
        %1415 = vmatprep.subr.mxu0 0.0
        %1416 = vmatpush2.msra.mxu0 0.0
        %1417 = vmatprep.subr.mxu0 0.0
        %1418 = vmatpush2.msra.mxu0 0.0
        %1419 = vmatprep.subr.mxu0 0.0
        %1420 = vmatpush2.msra.mxu0 0.0
        %1421 = vmatprep.subr.mxu0 0.0
        %1422 = vmatpush2.msra.mxu0 0.0
        %1423 = vmatprep.subr.mxu0 0.0
        %1424 = vmatpush2.msra.mxu0 0.0
        %1425 = vmatprep.subr.mxu0 0.0
        %1426 = vmatpush2.msra.mxu0 0.0
        %1427 = vmatprep.mubr.f32.mxu0 0.0
        %1428 = vmatmul.mubr.f32.gmra.mxu0 %v1290
        %v1429 = vpop.f32.mrf.mxu0
        %v1430 = vadd.f32 %v1287, %v1429
        %v1431 = vpop.f32.mrf.mxu0
        %v1432 = vadd.f32 %v1287, %v1431
        %1433 = vdwg.mxu0
        %v1438 = vcombine.low %v1359, %v1361
        %v1439 = vcombine.low %v1430, %v1432
        %v1441 = vunpack.c.l.s4 1983009808
        %v1442 = vunpack.c.0.s8 %v1441
        %v1443 = vlaneseq
        %v1444 = vshrl.u32 %v1443, 7
        %v1445 = vsub.s32 %v1442, %v1444
        %v1446 = vrot.slane %v1438, %v1445
        %v1448 = vunpack.c.l.s4 1983009808
        %v1449 = vunpack.c.0.s8 %v1448
        %v1450 = vlaneseq
        %v1451 = vshrl.u32 %v1450, 7
        %v1452 = vsub.s32 %v1449, %v1451
        %v1453 = vrot.slane %v1439, %v1452
        %v1454 = vcombine.low %v1446, %v1453
        %1456 = vst [vmem:[%s390] sm:$0xff] %v1454
        %s1457 = sand.u32 %s246, 1
        %s1458 = scalar_lea.sflag [#allocation3], %s1457
        %s1459 = sand.u32 %s246, 1
        %s1460 = smul.addr %s1459, 16
        %s1461 = scalar_lea.vmem [#allocation2], %s1460
        %s1462 = sand.u32 %s274, 1
        %s1463 = scalar_lea.sflag [#allocation5], %s1462
        %s1464 = sand.u32 %s274, 1
        %s1465 = smul.addr %s1464, 8
        %s1466 = scalar_lea.vmem [#allocation4], %s1465
        // Predicated region
        $region57: #{tpu_custom_call.1} parent=55 // pred_check
          %p1467 = pneg %p256
        $region58: #{tpu_custom_call.1} parent=55 // pred_check_branch
          %1469 = sbr.rel (%p1467) target = $region60
        $region59: #{tpu_custom_call.1} parent=55 // pred_region
          %s1470 = smul.u32 4, %s33
          %s1472 = ssub.s32 256, 256
          %1473 = vsyncadd %s1458, %s1472
          %s1474 = smul.addr %s32, 8
          %s1475 = sadd.s32 %s1470, %s1474
          %s1476 = smul.addr %s1475, 64
          %s1477 = scalar_lea.hbm %s9, %s1476
          %s1479 = sshll.u32 %s1461, 4
          %s1480 = int_to_ptr.vmem [resolvable:$true] %s1479
          %1482 = dma.vmem_to_hbm [thread:$0]  %s1480, 256, %s1477, %s1458
        $region60: #{tpu_custom_call.1} parent=55 // pred_fallthru
          _
        // Predicated region
        $region61: #{tpu_custom_call.1} parent=55 // pred_check
          %p1483 = pneg %p284
        $region62: #{tpu_custom_call.1} parent=55 // pred_check_branch
          %1485 = sbr.rel (%p1483) target = $region64
        $region63: #{tpu_custom_call.1} parent=55 // pred_region
          %s1486 = smul.u32 4, %s33
          %s1488 = ssub.s32 128, 128
          %1489 = vsyncadd %s1463, %s1488
          %s1490 = smul.addr %s32, 8
          %s1491 = sadd.s32 %s1486, %s1490
          %s1492 = smul.addr %s1491, 32
          %s1493 = scalar_lea.hbm %s10, %s1492
          %s1495 = sshll.u32 %s1466, 4
          %s1496 = int_to_ptr.vmem [resolvable:$true] %s1495
          %1498 = dma.vmem_to_hbm [thread:$0]  %s1496, 128, %s1493, %s1463
        $region64: #{tpu_custom_call.1} parent=55 // pred_fallthru
          _
      $region56: #{tpu_custom_call.1} parent=5 // pred_fallthru
        _
      %p1499 = scmp.le.s32.totalorder 2, %s23
      // Predicated region
      $region65: #{tpu_custom_call.1} parent=5 // pred_check
        %p1500 = pneg %p1499
      $region66: #{tpu_custom_call.1} parent=5 // pred_check_branch
        %1502 = sbr.rel (%p1500) target = $region68
      $region67: #{tpu_custom_call.1} parent=5 // pred_region
        %s1503 = ssub.s32 %s23, 2
        // Predicated region
        $region69: #{tpu_custom_call.1} parent=67 // pred_check
          %p1504 = pneg %p262
        $region70: #{tpu_custom_call.1} parent=67 // pred_check_branch
          %1506 = sbr.rel (%p1504) target = $region72
        $region71: #{tpu_custom_call.1} parent=67 // pred_region
          %s1507 = sand.u32 %s247, 1
          %s1508 = scalar_lea.sflag [#allocation3], %s1507
          %s1509 = sand.u32 %s247, 1
          %s1510 = smul.addr %s1509, 16
          %s1511 = scalar_lea.vmem [#allocation2], %s1510
          %1512 = dma.done %s1508, 256
        $region72: #{tpu_custom_call.1} parent=67 // pred_fallthru
          _
        // Predicated region
        $region73: #{tpu_custom_call.1} parent=67 // pred_check
          %p1513 = pneg %p290
        $region74: #{tpu_custom_call.1} parent=67 // pred_check_branch
          %1515 = sbr.rel (%p1513) target = $region76
        $region75: #{tpu_custom_call.1} parent=67 // pred_region
          %s1516 = sand.u32 %s275, 1
          %s1517 = scalar_lea.sflag [#allocation5], %s1516
          %s1518 = sand.u32 %s275, 1
          %s1519 = smul.addr %s1518, 8
          %s1520 = scalar_lea.vmem [#allocation4], %s1519
          %1521 = dma.done %s1517, 128
        $region76: #{tpu_custom_call.1} parent=67 // pred_fallthru
          _
      $region68: #{tpu_custom_call.1} parent=5 // pred_fallthru
        _
    $region6: #{tpu_custom_call.1} parent=1 // loop_footer
      %s27 = sadd.s32 1, %s23
    $region7: #{tpu_custom_call.1} parent=1 // loop_footer_branch
      %22 = sbr.rel target = $region3
    $region8: #{tpu_custom_call.1} parent=1 // loop_exit
      _
    %1522 = vsyncpa [#allocation3], 1
    %s1523 = scalar_lea.sflag [#allocation3], 1
    %1524 = vsyncpa %s1523, 1
    %1525 = vsyncpa [#allocation5], 1
    %s1526 = scalar_lea.sflag [#allocation5], 1
    %1527 = vsyncpa %s1526, 1

</llo_original>
